<compile_context>
chip_gen: v7x
topology: tpu7x:2x2x1
jax: 0.10.0
libtpu: 0.0.40
codegen_flags: <defaults>
</compile_context>

<pallas_src>
import functools

import jax
import jax.numpy as jnp
from jax.experimental import pallas as pl
from jax.experimental.pallas import tpu as pltpu

INPUT_SIZE = 17
HIDDEN = 128
H2 = HIDDEN // 2          # 64
H4 = HIDDEN // 4          # 32
N_HEAD = 16               # 1 + 3 + 10 + 1 + 1 fused head columns
EPS = 1e-5

# Row indices inside the packed (N_ROWS, 128) small-parameter slab.
R_FC1_B = 0
R_LN1_G, R_LN1_B = 1, 2
R_R1LN1_G, R_R1LN1_B = 3, 4
R_R1FC1_B = 5
R_R1LN2_G, R_R1LN2_B = 6, 7
R_R1FC2_B = 8
R_R2DS_B = 9
R_R2LN1_G, R_R2LN1_B = 10, 11
R_R2FC1_B = 12
R_R2LN2_G, R_R2LN2_B = 13, 14
R_R2FC2_B = 15
R_ATTN_B = 16
R_FCF_B = 17
R_LNF_G, R_LNF_B = 18, 19
R_HEAD_B = 20
R_QUANT = 21
N_ROWS = 22


def _layer_norm(x, g, b):
    m = jnp.mean(x, axis=-1, keepdims=True)
    v = jnp.mean((x - m) ** 2, axis=-1, keepdims=True)
    return (x - m) * jax.lax.rsqrt(v + EPS) * g + b


def _softmax(x):
    x = x - jnp.max(x, axis=-1, keepdims=True)
    e = jnp.exp(x)
    # divide on the (otherwise idle) EUP slot instead of the VALU
    return e * pl.reciprocal(jnp.sum(e, axis=-1, keepdims=True), approx=True)


def poker_kernel(x_ref, vec_ref, fc1_ref, w128_ref, wdn_ref, w64_ref,
                 fcf_ref, head_ref, out_ref):
    f32 = jnp.float32
    V = vec_ref[...]                                   # (N_ROWS, 128) f32

    def row(r, d):                                     # (1, d) slice of the slab
        return V[r:r + 1, :d]

    def mm(a, w):                                      # bf16 MXU matmul, f32 acc
        return jnp.dot(a.astype(jnp.bfloat16), w, preferred_element_type=f32)

    x = x_ref[...]                                     # (TB, 17) f32

    # --- fc1 (eval-mode BatchNorm folded in) -> LayerNorm -> ReLU ---
    h = mm(x, fc1_ref[...]) + row(R_FC1_B, HIDDEN)
    h = jnp.maximum(_layer_norm(h, row(R_LN1_G, HIDDEN), row(R_LN1_B, HIDDEN)), 0.0)

    # --- residual block 1 (128 -> 128); dropout = identity in eval mode ---
    identity = h
    t = _layer_norm(h, row(R_R1LN1_G, HIDDEN), row(R_R1LN1_B, HIDDEN))
    t = jnp.maximum(mm(t, w128_ref[0]) + row(R_R1FC1_B, HIDDEN), 0.0)
    t = _layer_norm(t, row(R_R1LN2_G, HIDDEN), row(R_R1LN2_B, HIDDEN))
    t = mm(t, w128_ref[1]) + row(R_R1FC2_B, HIDDEN)
    h = jnp.maximum(t + identity, 0.0)

    # --- residual block 2 (128 -> 64, downsample shortcut); no ReLU after add ---
    identity = mm(h, wdn_ref[0]) + row(R_R2DS_B, H2)
    t = _layer_norm(h, row(R_R2LN1_G, HIDDEN), row(R_R2LN1_B, HIDDEN))
    t = jnp.maximum(mm(t, wdn_ref[1]) + row(R_R2FC1_B, H2), 0.0)
    t = _layer_norm(t, row(R_R2LN2_G, H2), row(R_R2LN2_B, H2))
    t = mm(t, w64_ref[0]) + row(R_R2FC2_B, H2)
    h = t + identity

    # --- length-1-sequence self-attention, fused to a single 64x64 matmul ---
    h = h + (mm(h, w64_ref[1]) + row(R_ATTN_B, H2))

    # --- fc_final -> LayerNorm -> ReLU ---
    h = mm(h, fcf_ref[...]) + row(R_FCF_B, H4)
    h = jnp.maximum(_layer_norm(h, row(R_LNF_G, H4), row(R_LNF_B, H4)), 0.0)

    # --- fused heads: [value(1) | advantage(3) | bet(10) | value_head(1) | conf(1)] ---
    heads = mm(h, head_ref[...]) + row(R_HEAD_B, N_HEAD)       # (TB, 16)
    value = heads[:, 0:1]
    advantage = heads[:, 1:4]
    action = value + advantage - jnp.mean(advantage, axis=-1, keepdims=True)
    action_probs = _softmax(action)                            # (TB, 3)
    bet_probs = _softmax(heads[:, 4:14])                       # (TB, 10)
    bet_size = jnp.sum(bet_probs * row(R_QUANT, 10), axis=-1, keepdims=True)
    value_out = heads[:, 14:15]
    conf_out = jax.nn.sigmoid(heads[:, 15:16])

    # --- single lane-dense (TB, 128) output block; wrapper slices columns 0..5 ---
    out_ref[...] = jnp.zeros_like(out_ref)
    out_ref[:, 0:3] = action_probs
    out_ref[:, 3:4] = bet_size
    out_ref[:, 4:5] = value_out
    out_ref[:, 5:6] = conf_out


# ----------------------------------------------------------------------------- #
# Parameter construction & packing                                               #
# ----------------------------------------------------------------------------- #

def init_raw_params(key, input_size=INPUT_SIZE, hidden=HIDDEN):
    """Deterministic synthetic parameters (orthogonal weights, small random
    biases / norm params so that the host-side constant folds are exercised)."""
    h2, h4 = hidden // 2, hidden // 4
    ortho = jax.nn.initializers.orthogonal(scale=1.414)
    ks = jax.random.split(key, 48)
    it = iter(range(48))

    def lin(d_in, d_out):
        w = ortho(ks[next(it)], (d_in, d_out), jnp.float32)
        b = 0.02 * jax.random.normal(ks[next(it)], (1, d_out), jnp.float32)
        return w, b

    def ln(d):
        g = 1.0 + 0.1 * jax.random.normal(ks[next(it)], (1, d), jnp.float32)
        b = 0.05 * jax.random.normal(ks[next(it)], (1, d), jnp.float32)
        return g, b

    p = {}
    p["fc1"] = lin(input_size, hidden)
    p["r1fc1"] = lin(hidden, hidden)
    p["r1fc2"] = lin(hidden, hidden)
    p["r2fc1"] = lin(hidden, h2)
    p["r2fc2"] = lin(h2, h2)
    p["r2ds"] = lin(hidden, h2)
    p["attn_v"] = lin(h2, h2)          # V slice of the MHA in_proj
    p["attn_o"] = lin(h2, h2)          # MHA out_proj
    p["fcf"] = lin(h2, h4)
    p["av"] = lin(h4, 1)
    p["aa"] = lin(h4, 3)
    p["bh"] = lin(h4, 10)
    p["vh"] = lin(h4, 1)
    p["ch"] = lin(h4, 1)

    # eval-mode BatchNorm1d affine params / running statistics
    bn_g = 1.0 + 0.1 * jax.random.normal(ks[next(it)], (1, input_size), jnp.float32)
    bn_b = 0.05 * jax.random.normal(ks[next(it)], (1, input_size), jnp.float32)
    bn_rm = 0.1 * jax.random.normal(ks[next(it)], (1, input_size), jnp.float32)
    bn_rv = 0.5 + jax.random.uniform(ks[next(it)], (1, input_size), jnp.float32)
    p["bn"] = (bn_g, bn_b, bn_rm, bn_rv)

    p["ln1"] = ln(hidden)
    p["r1ln1"] = ln(hidden)
    p["r1ln2"] = ln(hidden)
    p["r2ln1"] = ln(hidden)
    p["r2ln2"] = ln(h2)
    p["lnf"] = ln(h4)
    return p


def pack_params(p):
    """Host-side constant folds + packing into a few lane-friendly slabs."""
    # Fold eval-mode BatchNorm into fc1: BN(x) = x*scale + shift.
    bn_g, bn_b, bn_rm, bn_rv = p["bn"]
    scale = bn_g * jax.lax.rsqrt(bn_rv + EPS)                  # (1, 17)
    shift = bn_b - bn_rm * scale                               # (1, 17)
    fc1_w, fc1_b = p["fc1"]
    fc1_w_f = scale.reshape(-1, 1) * fc1_w                     # (17, 128)
    fc1_b_f = shift @ fc1_w + fc1_b                            # (1, 128)

    # Fuse length-1 attention: out_proj(v_proj(h)) = h @ (Wv@Wo) + (bv@Wo + bo).
    vw, vb = p["attn_v"]
    ow, ob = p["attn_o"]
    attn_w = vw @ ow                                           # (64, 64)
    attn_b = vb @ ow + ob                                      # (1, 64)

    # Fuse the five heads into one (32, 16) matmul.
    head_w = jnp.concatenate(
        [p["av"][0], p["aa"][0], p["bh"][0], p["vh"][0], p["ch"][0]], axis=1)
    head_b = jnp.concatenate(
        [p["av"][1], p["aa"][1], p["bh"][1], p["vh"][1], p["ch"][1]], axis=1)

    quant = jnp.linspace(0.1, 1.0, 10, dtype=jnp.float32).reshape(1, 10)

    def row(v):
        v = jnp.asarray(v, jnp.float32).reshape(-1)
        return jnp.pad(v, (0, 128 - v.shape[0]))

    rows = [jnp.zeros((128,), jnp.float32)] * N_ROWS
    rows[R_FC1_B] = row(fc1_b_f)
    rows[R_LN1_G], rows[R_LN1_B] = row(p["ln1"][0]), row(p["ln1"][1])
    rows[R_R1LN1_G], rows[R_R1LN1_B] = row(p["r1ln1"][0]), row(p["r1ln1"][1])
    rows[R_R1FC1_B] = row(p["r1fc1"][1])
    rows[R_R1LN2_G], rows[R_R1LN2_B] = row(p["r1ln2"][0]), row(p["r1ln2"][1])
    rows[R_R1FC2_B] = row(p["r1fc2"][1])
    rows[R_R2DS_B] = row(p["r2ds"][1])
    rows[R_R2LN1_G], rows[R_R2LN1_B] = row(p["r2ln1"][0]), row(p["r2ln1"][1])
    rows[R_R2FC1_B] = row(p["r2fc1"][1])
    rows[R_R2LN2_G], rows[R_R2LN2_B] = row(p["r2ln2"][0]), row(p["r2ln2"][1])
    rows[R_R2FC2_B] = row(p["r2fc2"][1])
    rows[R_ATTN_B] = row(attn_b)
    rows[R_FCF_B] = row(p["fcf"][1])
    rows[R_LNF_G], rows[R_LNF_B] = row(p["lnf"][0]), row(p["lnf"][1])
    rows[R_HEAD_B] = row(head_b)
    rows[R_QUANT] = row(quant)
    vecs = jnp.stack(rows, axis=0)                             # (22, 128) f32

    bf16 = jnp.bfloat16
    w_fc1 = fc1_w_f.astype(bf16)                               # (17, 128)
    w128 = jnp.stack([p["r1fc1"][0], p["r1fc2"][0]]).astype(bf16)   # (2,128,128)
    w_dn = jnp.stack([p["r2ds"][0], p["r2fc1"][0]]).astype(bf16)    # (2,128, 64)
    w64 = jnp.stack([p["r2fc2"][0], attn_w]).astype(bf16)           # (2, 64, 64)
    w_fcf = p["fcf"][0].astype(bf16)                                # (64, 32)
    w_head = head_w.astype(bf16)                                    # (32, 16)
    return (vecs, w_fc1, w128, w_dn, w64, w_fcf, w_head)


# ----------------------------------------------------------------------------- #
# Wrapper                                                                         #
# ----------------------------------------------------------------------------- #

def _round_up(n, m):
    return ((n + m - 1) // m) * m


@functools.partial(jax.jit, static_argnames=("block_b",))
def poker_forward(x, packed, block_b=256):
    vecs, w_fc1, w128, w_dn, w64, w_fcf, w_head = packed
    B = x.shape[0]
    tb = min(block_b, _round_up(B, 8))           # batch tile, multiple of 8
    b_pad = _round_up(B, tb)
    if b_pad != B:
        x = jnp.concatenate(
            [x, jnp.zeros((b_pad - B, x.shape[1]), x.dtype)], axis=0)

    const2 = lambda i: (0, 0)
    const3 = lambda i: (0, 0, 0)

    out = pl.pallas_call(
        poker_kernel,
        out_shape=jax.ShapeDtypeStruct((b_pad, 128), jnp.float32),
        grid=(b_pad // tb,),
        in_specs=[
            pl.BlockSpec((tb, INPUT_SIZE), lambda i: (i, 0)),   # activations: pipelined
            pl.BlockSpec(vecs.shape, const2),                   # weights: VMEM-resident
            pl.BlockSpec(w_fc1.shape, const2),
            pl.BlockSpec(w128.shape, const3),
            pl.BlockSpec(w_dn.shape, const3),
            pl.BlockSpec(w64.shape, const3),
            pl.BlockSpec(w_fcf.shape, const2),
            pl.BlockSpec(w_head.shape, const2),
        ],
        out_specs=pl.BlockSpec((tb, 128), lambda i: (i, 0)),
        compiler_params=pltpu.CompilerParams(
            dimension_semantics=("parallel",)),
    )(x, vecs, w_fc1, w128, w_dn, w64, w_fcf, w_head)

    out = out[:B]
    action_probs = out[:, 0:3]
    bet_size = out[:, 3:4]
    value_output = out[:, 4:5]
    confidence_output = out[:, 5:6]
    return action_probs, bet_size, value_output, confidence_output


# ----------------------------------------------------------------------------- #
# Pure-JAX f32 reference of the (unfused) eval-mode batch>1 forward, for checks  #
# ----------------------------------------------------------------------------- #

def reference_forward(x, p):
    def ln_f(v, g, b):
        m = v.mean(-1, keepdims=True)
        var = ((v - m) ** 2).mean(-1, keepdims=True)
        return (v - m) * jax.lax.rsqrt(var + EPS) * g + b

    bn_g, bn_b, bn_rm, bn_rv = p["bn"]
    x = (x - bn_rm) * jax.lax.rsqrt(bn_rv + EPS) * bn_g + bn_b
    h = jax.nn.relu(ln_f(x @ p["fc1"][0] + p["fc1"][1], *p["ln1"]))
    idn = h
    t = ln_f(h, *p["r1ln1"])
    t = jax.nn.relu(t @ p["r1fc1"][0] + p["r1fc1"][1])
    t = ln_f(t, *p["r1ln2"])
    t = t @ p["r1fc2"][0] + p["r1fc2"][1]
    h = jax.nn.relu(t + idn)
    idn = h @ p["r2ds"][0] + p["r2ds"][1]
    t = ln_f(h, *p["r2ln1"])
    t = jax.nn.relu(t @ p["r2fc1"][0] + p["r2fc1"][1])
    t = ln_f(t, *p["r2ln2"])
    t = t @ p["r2fc2"][0] + p["r2fc2"][1]
    h = t + idn
    v = h @ p["attn_v"][0] + p["attn_v"][1]
    h = h + (v @ p["attn_o"][0] + p["attn_o"][1])
    h = jax.nn.relu(ln_f(h @ p["fcf"][0] + p["fcf"][1], *p["lnf"]))
    value = h @ p["av"][0] + p["av"][1]
    adv = h @ p["aa"][0] + p["aa"][1]
    action = value + adv - adv.mean(-1, keepdims=True)
    ap = jax.nn.softmax(action, axis=-1)
    bp = jax.nn.softmax(h @ p["bh"][0] + p["bh"][1], axis=-1)
    quant = jnp.linspace(0.1, 1.0, 10, dtype=jnp.float32).reshape(1, 10)
    bs = jnp.sum(bp * quant, axis=-1, keepdims=True)
    vo = h @ p["vh"][0] + p["vh"][1]
    co = jax.nn.sigmoid(h @ p["ch"][0] + p["ch"][1])
    return ap, bs, vo, co


# TODO(synk): the training-mode batch==1 branch (active dropout, norm-free path)
# is intentionally not implemented; this kernel covers the inference/batch path.

if __name__ == "__main__":
    key = jax.random.PRNGKey(0)
    pkey, xkey = jax.random.split(key)
    raw = init_raw_params(pkey)
    packed = pack_params(raw)
    x = jax.random.normal(xkey, (8, INPUT_SIZE), dtype=jnp.float32)

    outs = jax.block_until_ready(poker_forward(x, packed))
    action_probs, bet_size, value_out, confidence = outs

    assert action_probs.shape == (8, 3)
    assert bet_size.shape == (8, 1)
    assert value_out.shape == (8, 1)
    assert confidence.shape == (8, 1)
    for o in outs:
        assert bool(jnp.all(jnp.isfinite(o)))
    assert bool(jnp.allclose(jnp.sum(action_probs, axis=1), 1.0, atol=1e-2))
    assert bool(jnp.all((confidence > 0.0) & (confidence < 1.0)))

    # Cross-check against a pure-JAX f32 reference of the unfused network.
    # Loose tolerance: kernel uses bf16 MXU operands + EUP approx reciprocal.
    ref = reference_forward(x, raw)
    names = ("action_probs", "bet_size", "value_output", "confidence_output")
    for name, a, b in zip(names, outs, ref):
        assert bool(jnp.allclose(a, b, atol=0.1, rtol=0.1)), name

    print("KERNEL_OK")
</pallas_src>

<mosaic_0001>
module attributes {stable_mosaic.version = 11 : i64} {
  func.func @poker_kernel(%arg0: i32, %arg1: memref<8x17xf32, #tpu.memory_space<vmem>>, %arg2: memref<22x128xf32, #tpu.memory_space<vmem>>, %arg3: memref<17x128xbf16, #tpu.memory_space<vmem>>, %arg4: memref<2x128x128xbf16, #tpu.memory_space<vmem>>, %arg5: memref<2x128x64xbf16, #tpu.memory_space<vmem>>, %arg6: memref<2x64x64xbf16, #tpu.memory_space<vmem>>, %arg7: memref<64x32xbf16, #tpu.memory_space<vmem>>, %arg8: memref<32x16xbf16, #tpu.memory_space<vmem>>, %arg9: memref<8x128xf32, #tpu.memory_space<vmem>>) attributes {dimension_semantics = [#tpu.dimension_semantics<parallel>], iteration_bounds = array<i64: 1>, scalar_prefetch = 0 : i64, scratch_operands = 0 : i64, tpu.core_type = #tpu.core_type<tc>, window_params = [{transform_indices = @transform_0, window_bounds = array<i64: 8, 17>}, {pipeline_mode = #tpu.pipeline_mode<synchronous>, transform_indices = @transform_1, window_bounds = array<i64: 22, 128>}, {pipeline_mode = #tpu.pipeline_mode<synchronous>, transform_indices = @transform_2, window_bounds = array<i64: 17, 128>}, {pipeline_mode = #tpu.pipeline_mode<synchronous>, transform_indices = @transform_3, window_bounds = array<i64: 2, 128, 128>}, {pipeline_mode = #tpu.pipeline_mode<synchronous>, transform_indices = @transform_4, window_bounds = array<i64: 2, 128, 64>}, {pipeline_mode = #tpu.pipeline_mode<synchronous>, transform_indices = @transform_5, window_bounds = array<i64: 2, 64, 64>}, {pipeline_mode = #tpu.pipeline_mode<synchronous>, transform_indices = @transform_6, window_bounds = array<i64: 64, 32>}, {pipeline_mode = #tpu.pipeline_mode<synchronous>, transform_indices = @transform_7, window_bounds = array<i64: 32, 16>}, {transform_indices = @transform_8, window_bounds = array<i64: 8, 128>}]} {
    %c0 = arith.constant 0 : index
    %c0_0 = arith.constant 0 : index
    %0 = vector.load %arg2[%c0, %c0_0] : memref<22x128xf32, #tpu.memory_space<vmem>>, vector<22x128xf32>
    %c0_1 = arith.constant 0 : index
    %c0_2 = arith.constant 0 : index
    %1 = vector.load %arg1[%c0_1, %c0_2] : memref<8x17xf32, #tpu.memory_space<vmem>>, vector<8x17xf32>
    %c0_3 = arith.constant 0 : index
    %c0_4 = arith.constant 0 : index
    %2 = vector.load %arg3[%c0_3, %c0_4] : memref<17x128xbf16, #tpu.memory_space<vmem>>, vector<17x128xbf16>
    %3 = arith.truncf %1 : vector<8x17xf32> to vector<8x17xbf16>
    %cst = arith.constant dense<0.000000e+00> : vector<8x128xf32>
    %4 = tpu.matmul %3, %2, %cst {dimension_numbers = #tpu.dot_dimension_numbers<[1], [0], [0], [1], [0, 0, 1, 1], [], []>} : vector<8x17xbf16>, vector<17x128xbf16>, vector<8x128xf32> -> vector<8x128xf32>
    %5 = vector.extract_strided_slice %0 {offsets = [0, 0], sizes = [1, 128], strides = [1, 1]} : vector<22x128xf32> to vector<1x128xf32>
    %6 = vector.broadcast %5 : vector<1x128xf32> to vector<8x128xf32>
    %7 = arith.addf %4, %6 : vector<8x128xf32>
    %8 = vector.extract_strided_slice %0 {offsets = [1, 0], sizes = [1, 128], strides = [1, 1]} : vector<22x128xf32> to vector<1x128xf32>
    %9 = vector.extract_strided_slice %0 {offsets = [2, 0], sizes = [1, 128], strides = [1, 1]} : vector<22x128xf32> to vector<1x128xf32>
    %cst_5 = arith.constant dense<0.000000e+00> : vector<8xf32>
    %10 = vector.multi_reduction <add>, %7, %cst_5 [1] : vector<8x128xf32> to vector<8xf32>
    %11 = vector.shape_cast %10 : vector<8xf32> to vector<8x1xf32>
    %cst_6 = arith.constant 1.280000e+02 : f32
    %12 = vector.broadcast %cst_6 : f32 to vector<8x1xf32>
    %13 = arith.divf %11, %12 : vector<8x1xf32>
    %14 = vector.broadcast %13 : vector<8x1xf32> to vector<8x128xf32>
    %15 = arith.subf %7, %14 : vector<8x128xf32>
    %16 = arith.mulf %15, %15 : vector<8x128xf32>
    %cst_7 = arith.constant dense<0.000000e+00> : vector<8xf32>
    %17 = vector.multi_reduction <add>, %16, %cst_7 [1] : vector<8x128xf32> to vector<8xf32>
    %18 = vector.shape_cast %17 : vector<8xf32> to vector<8x1xf32>
    %cst_8 = arith.constant 1.280000e+02 : f32
    %19 = vector.broadcast %cst_8 : f32 to vector<8x1xf32>
    %20 = arith.divf %18, %19 : vector<8x1xf32>
    %21 = vector.broadcast %13 : vector<8x1xf32> to vector<8x128xf32>
    %22 = arith.subf %7, %21 : vector<8x128xf32>
    %cst_9 = arith.constant 9.99999974E-6 : f32
    %23 = vector.broadcast %cst_9 : f32 to vector<8x1xf32>
    %24 = arith.addf %20, %23 : vector<8x1xf32>
    %25 = math.rsqrt %24 : vector<8x1xf32>
    %26 = vector.broadcast %25 : vector<8x1xf32> to vector<8x128xf32>
    %27 = arith.mulf %22, %26 : vector<8x128xf32>
    %28 = vector.broadcast %8 : vector<1x128xf32> to vector<8x128xf32>
    %29 = arith.mulf %27, %28 : vector<8x128xf32>
    %30 = vector.broadcast %9 : vector<1x128xf32> to vector<8x128xf32>
    %31 = arith.addf %29, %30 : vector<8x128xf32>
    %cst_10 = arith.constant 0.000000e+00 : f32
    %32 = vector.broadcast %cst_10 : f32 to vector<8x128xf32>
    %33 = arith.maximumf %31, %32 : vector<8x128xf32>
    %34 = vector.extract_strided_slice %0 {offsets = [3, 0], sizes = [1, 128], strides = [1, 1]} : vector<22x128xf32> to vector<1x128xf32>
    %35 = vector.extract_strided_slice %0 {offsets = [4, 0], sizes = [1, 128], strides = [1, 1]} : vector<22x128xf32> to vector<1x128xf32>
    %cst_11 = arith.constant dense<0.000000e+00> : vector<8xf32>
    %36 = vector.multi_reduction <add>, %33, %cst_11 [1] : vector<8x128xf32> to vector<8xf32>
    %37 = vector.shape_cast %36 : vector<8xf32> to vector<8x1xf32>
    %cst_12 = arith.constant 1.280000e+02 : f32
    %38 = vector.broadcast %cst_12 : f32 to vector<8x1xf32>
    %39 = arith.divf %37, %38 : vector<8x1xf32>
    %40 = vector.broadcast %39 : vector<8x1xf32> to vector<8x128xf32>
    %41 = arith.subf %33, %40 : vector<8x128xf32>
    %42 = arith.mulf %41, %41 : vector<8x128xf32>
    %cst_13 = arith.constant dense<0.000000e+00> : vector<8xf32>
    %43 = vector.multi_reduction <add>, %42, %cst_13 [1] : vector<8x128xf32> to vector<8xf32>
    %44 = vector.shape_cast %43 : vector<8xf32> to vector<8x1xf32>
    %cst_14 = arith.constant 1.280000e+02 : f32
    %45 = vector.broadcast %cst_14 : f32 to vector<8x1xf32>
    %46 = arith.divf %44, %45 : vector<8x1xf32>
    %47 = vector.broadcast %39 : vector<8x1xf32> to vector<8x128xf32>
    %48 = arith.subf %33, %47 : vector<8x128xf32>
    %cst_15 = arith.constant 9.99999974E-6 : f32
    %49 = vector.broadcast %cst_15 : f32 to vector<8x1xf32>
    %50 = arith.addf %46, %49 : vector<8x1xf32>
    %51 = math.rsqrt %50 : vector<8x1xf32>
    %52 = vector.broadcast %51 : vector<8x1xf32> to vector<8x128xf32>
    %53 = arith.mulf %48, %52 : vector<8x128xf32>
    %54 = vector.broadcast %34 : vector<1x128xf32> to vector<8x128xf32>
    %55 = arith.mulf %53, %54 : vector<8x128xf32>
    %56 = vector.broadcast %35 : vector<1x128xf32> to vector<8x128xf32>
    %57 = arith.addf %55, %56 : vector<8x128xf32>
    %c0_16 = arith.constant 0 : index
    %c0_17 = arith.constant 0 : index
    %c0_18 = arith.constant 0 : index
    %58 = vector.load %arg4[%c0_16, %c0_17, %c0_18] : memref<2x128x128xbf16, #tpu.memory_space<vmem>>, vector<1x128x128xbf16>
    %59 = vector.shape_cast %58 : vector<1x128x128xbf16> to vector<128x128xbf16>
    %60 = arith.truncf %57 : vector<8x128xf32> to vector<8x128xbf16>
    %cst_19 = arith.constant dense<0.000000e+00> : vector<8x128xf32>
    %61 = tpu.matmul %60, %59, %cst_19 {dimension_numbers = #tpu.dot_dimension_numbers<[1], [0], [0], [1], [0, 0, 1, 1], [], []>} : vector<8x128xbf16>, vector<128x128xbf16>, vector<8x128xf32> -> vector<8x128xf32>
    %62 = vector.extract_strided_slice %0 {offsets = [5, 0], sizes = [1, 128], strides = [1, 1]} : vector<22x128xf32> to vector<1x128xf32>
    %63 = vector.broadcast %62 : vector<1x128xf32> to vector<8x128xf32>
    %64 = arith.addf %61, %63 : vector<8x128xf32>
    %cst_20 = arith.constant 0.000000e+00 : f32
    %65 = vector.broadcast %cst_20 : f32 to vector<8x128xf32>
    %66 = arith.maximumf %64, %65 : vector<8x128xf32>
    %67 = vector.extract_strided_slice %0 {offsets = [6, 0], sizes = [1, 128], strides = [1, 1]} : vector<22x128xf32> to vector<1x128xf32>
    %68 = vector.extract_strided_slice %0 {offsets = [7, 0], sizes = [1, 128], strides = [1, 1]} : vector<22x128xf32> to vector<1x128xf32>
    %cst_21 = arith.constant dense<0.000000e+00> : vector<8xf32>
    %69 = vector.multi_reduction <add>, %66, %cst_21 [1] : vector<8x128xf32> to vector<8xf32>
    %70 = vector.shape_cast %69 : vector<8xf32> to vector<8x1xf32>
    %cst_22 = arith.constant 1.280000e+02 : f32
    %71 = vector.broadcast %cst_22 : f32 to vector<8x1xf32>
    %72 = arith.divf %70, %71 : vector<8x1xf32>
    %73 = vector.broadcast %72 : vector<8x1xf32> to vector<8x128xf32>
    %74 = arith.subf %66, %73 : vector<8x128xf32>
    %75 = arith.mulf %74, %74 : vector<8x128xf32>
    %cst_23 = arith.constant dense<0.000000e+00> : vector<8xf32>
    %76 = vector.multi_reduction <add>, %75, %cst_23 [1] : vector<8x128xf32> to vector<8xf32>
    %77 = vector.shape_cast %76 : vector<8xf32> to vector<8x1xf32>
    %cst_24 = arith.constant 1.280000e+02 : f32
    %78 = vector.broadcast %cst_24 : f32 to vector<8x1xf32>
    %79 = arith.divf %77, %78 : vector<8x1xf32>
    %80 = vector.broadcast %72 : vector<8x1xf32> to vector<8x128xf32>
    %81 = arith.subf %66, %80 : vector<8x128xf32>
    %cst_25 = arith.constant 9.99999974E-6 : f32
    %82 = vector.broadcast %cst_25 : f32 to vector<8x1xf32>
    %83 = arith.addf %79, %82 : vector<8x1xf32>
    %84 = math.rsqrt %83 : vector<8x1xf32>
    %85 = vector.broadcast %84 : vector<8x1xf32> to vector<8x128xf32>
    %86 = arith.mulf %81, %85 : vector<8x128xf32>
    %87 = vector.broadcast %67 : vector<1x128xf32> to vector<8x128xf32>
    %88 = arith.mulf %86, %87 : vector<8x128xf32>
    %89 = vector.broadcast %68 : vector<1x128xf32> to vector<8x128xf32>
    %90 = arith.addf %88, %89 : vector<8x128xf32>
    %c1 = arith.constant 1 : index
    %c0_26 = arith.constant 0 : index
    %c0_27 = arith.constant 0 : index
    %91 = vector.load %arg4[%c1, %c0_26, %c0_27] : memref<2x128x128xbf16, #tpu.memory_space<vmem>>, vector<1x128x128xbf16>
    %92 = vector.shape_cast %91 : vector<1x128x128xbf16> to vector<128x128xbf16>
    %93 = arith.truncf %90 : vector<8x128xf32> to vector<8x128xbf16>
    %cst_28 = arith.constant dense<0.000000e+00> : vector<8x128xf32>
    %94 = tpu.matmul %93, %92, %cst_28 {dimension_numbers = #tpu.dot_dimension_numbers<[1], [0], [0], [1], [0, 0, 1, 1], [], []>} : vector<8x128xbf16>, vector<128x128xbf16>, vector<8x128xf32> -> vector<8x128xf32>
    %95 = vector.extract_strided_slice %0 {offsets = [8, 0], sizes = [1, 128], strides = [1, 1]} : vector<22x128xf32> to vector<1x128xf32>
    %96 = vector.broadcast %95 : vector<1x128xf32> to vector<8x128xf32>
    %97 = arith.addf %94, %96 : vector<8x128xf32>
    %98 = arith.addf %97, %33 : vector<8x128xf32>
    %cst_29 = arith.constant 0.000000e+00 : f32
    %99 = vector.broadcast %cst_29 : f32 to vector<8x128xf32>
    %100 = arith.maximumf %98, %99 : vector<8x128xf32>
    %c0_30 = arith.constant 0 : index
    %c0_31 = arith.constant 0 : index
    %c0_32 = arith.constant 0 : index
    %101 = vector.load %arg5[%c0_30, %c0_31, %c0_32] : memref<2x128x64xbf16, #tpu.memory_space<vmem>>, vector<1x128x64xbf16>
    %102 = vector.shape_cast %101 : vector<1x128x64xbf16> to vector<128x64xbf16>
    %103 = arith.truncf %100 : vector<8x128xf32> to vector<8x128xbf16>
    %cst_33 = arith.constant dense<0.000000e+00> : vector<8x64xf32>
    %104 = tpu.matmul %103, %102, %cst_33 {dimension_numbers = #tpu.dot_dimension_numbers<[1], [0], [0], [1], [0, 0, 1, 1], [], []>} : vector<8x128xbf16>, vector<128x64xbf16>, vector<8x64xf32> -> vector<8x64xf32>
    %105 = vector.extract_strided_slice %0 {offsets = [9, 0], sizes = [1, 64], strides = [1, 1]} : vector<22x128xf32> to vector<1x64xf32>
    %106 = vector.broadcast %105 : vector<1x64xf32> to vector<8x64xf32>
    %107 = arith.addf %104, %106 : vector<8x64xf32>
    %108 = vector.extract_strided_slice %0 {offsets = [10, 0], sizes = [1, 128], strides = [1, 1]} : vector<22x128xf32> to vector<1x128xf32>
    %109 = vector.extract_strided_slice %0 {offsets = [11, 0], sizes = [1, 128], strides = [1, 1]} : vector<22x128xf32> to vector<1x128xf32>
    %cst_34 = arith.constant dense<0.000000e+00> : vector<8xf32>
    %110 = vector.multi_reduction <add>, %100, %cst_34 [1] : vector<8x128xf32> to vector<8xf32>
    %111 = vector.shape_cast %110 : vector<8xf32> to vector<8x1xf32>
    %cst_35 = arith.constant 1.280000e+02 : f32
    %112 = vector.broadcast %cst_35 : f32 to vector<8x1xf32>
    %113 = arith.divf %111, %112 : vector<8x1xf32>
    %114 = vector.broadcast %113 : vector<8x1xf32> to vector<8x128xf32>
    %115 = arith.subf %100, %114 : vector<8x128xf32>
    %116 = arith.mulf %115, %115 : vector<8x128xf32>
    %cst_36 = arith.constant dense<0.000000e+00> : vector<8xf32>
    %117 = vector.multi_reduction <add>, %116, %cst_36 [1] : vector<8x128xf32> to vector<8xf32>
    %118 = vector.shape_cast %117 : vector<8xf32> to vector<8x1xf32>
    %cst_37 = arith.constant 1.280000e+02 : f32
    %119 = vector.broadcast %cst_37 : f32 to vector<8x1xf32>
    %120 = arith.divf %118, %119 : vector<8x1xf32>
    %121 = vector.broadcast %113 : vector<8x1xf32> to vector<8x128xf32>
    %122 = arith.subf %100, %121 : vector<8x128xf32>
    %cst_38 = arith.constant 9.99999974E-6 : f32
    %123 = vector.broadcast %cst_38 : f32 to vector<8x1xf32>
    %124 = arith.addf %120, %123 : vector<8x1xf32>
    %125 = math.rsqrt %124 : vector<8x1xf32>
    %126 = vector.broadcast %125 : vector<8x1xf32> to vector<8x128xf32>
    %127 = arith.mulf %122, %126 : vector<8x128xf32>
    %128 = vector.broadcast %108 : vector<1x128xf32> to vector<8x128xf32>
    %129 = arith.mulf %127, %128 : vector<8x128xf32>
    %130 = vector.broadcast %109 : vector<1x128xf32> to vector<8x128xf32>
    %131 = arith.addf %129, %130 : vector<8x128xf32>
    %c1_39 = arith.constant 1 : index
    %c0_40 = arith.constant 0 : index
    %c0_41 = arith.constant 0 : index
    %132 = vector.load %arg5[%c1_39, %c0_40, %c0_41] : memref<2x128x64xbf16, #tpu.memory_space<vmem>>, vector<1x128x64xbf16>
    %133 = vector.shape_cast %132 : vector<1x128x64xbf16> to vector<128x64xbf16>
    %134 = arith.truncf %131 : vector<8x128xf32> to vector<8x128xbf16>
    %cst_42 = arith.constant dense<0.000000e+00> : vector<8x64xf32>
    %135 = tpu.matmul %134, %133, %cst_42 {dimension_numbers = #tpu.dot_dimension_numbers<[1], [0], [0], [1], [0, 0, 1, 1], [], []>} : vector<8x128xbf16>, vector<128x64xbf16>, vector<8x64xf32> -> vector<8x64xf32>
    %136 = vector.extract_strided_slice %0 {offsets = [12, 0], sizes = [1, 64], strides = [1, 1]} : vector<22x128xf32> to vector<1x64xf32>
    %137 = vector.broadcast %136 : vector<1x64xf32> to vector<8x64xf32>
    %138 = arith.addf %135, %137 : vector<8x64xf32>
    %cst_43 = arith.constant 0.000000e+00 : f32
    %139 = vector.broadcast %cst_43 : f32 to vector<8x64xf32>
    %140 = arith.maximumf %138, %139 : vector<8x64xf32>
    %141 = vector.extract_strided_slice %0 {offsets = [13, 0], sizes = [1, 64], strides = [1, 1]} : vector<22x128xf32> to vector<1x64xf32>
    %142 = vector.extract_strided_slice %0 {offsets = [14, 0], sizes = [1, 64], strides = [1, 1]} : vector<22x128xf32> to vector<1x64xf32>
    %cst_44 = arith.constant dense<0.000000e+00> : vector<8xf32>
    %143 = vector.multi_reduction <add>, %140, %cst_44 [1] : vector<8x64xf32> to vector<8xf32>
    %144 = vector.shape_cast %143 : vector<8xf32> to vector<8x1xf32>
    %cst_45 = arith.constant 6.400000e+01 : f32
    %145 = vector.broadcast %cst_45 : f32 to vector<8x1xf32>
    %146 = arith.divf %144, %145 : vector<8x1xf32>
    %147 = vector.broadcast %146 : vector<8x1xf32> to vector<8x64xf32>
    %148 = arith.subf %140, %147 : vector<8x64xf32>
    %149 = arith.mulf %148, %148 : vector<8x64xf32>
    %cst_46 = arith.constant dense<0.000000e+00> : vector<8xf32>
    %150 = vector.multi_reduction <add>, %149, %cst_46 [1] : vector<8x64xf32> to vector<8xf32>
    %151 = vector.shape_cast %150 : vector<8xf32> to vector<8x1xf32>
    %cst_47 = arith.constant 6.400000e+01 : f32
    %152 = vector.broadcast %cst_47 : f32 to vector<8x1xf32>
    %153 = arith.divf %151, %152 : vector<8x1xf32>
    %154 = vector.broadcast %146 : vector<8x1xf32> to vector<8x64xf32>
    %155 = arith.subf %140, %154 : vector<8x64xf32>
    %cst_48 = arith.constant 9.99999974E-6 : f32
    %156 = vector.broadcast %cst_48 : f32 to vector<8x1xf32>
    %157 = arith.addf %153, %156 : vector<8x1xf32>
    %158 = math.rsqrt %157 : vector<8x1xf32>
    %159 = vector.broadcast %158 : vector<8x1xf32> to vector<8x64xf32>
    %160 = arith.mulf %155, %159 : vector<8x64xf32>
    %161 = vector.broadcast %141 : vector<1x64xf32> to vector<8x64xf32>
    %162 = arith.mulf %160, %161 : vector<8x64xf32>
    %163 = vector.broadcast %142 : vector<1x64xf32> to vector<8x64xf32>
    %164 = arith.addf %162, %163 : vector<8x64xf32>
    %c0_49 = arith.constant 0 : index
    %c0_50 = arith.constant 0 : index
    %c0_51 = arith.constant 0 : index
    %165 = vector.load %arg6[%c0_49, %c0_50, %c0_51] : memref<2x64x64xbf16, #tpu.memory_space<vmem>>, vector<1x64x64xbf16>
    %166 = vector.shape_cast %165 : vector<1x64x64xbf16> to vector<64x64xbf16>
    %167 = arith.truncf %164 : vector<8x64xf32> to vector<8x64xbf16>
    %cst_52 = arith.constant dense<0.000000e+00> : vector<8x64xf32>
    %168 = tpu.matmul %167, %166, %cst_52 {dimension_numbers = #tpu.dot_dimension_numbers<[1], [0], [0], [1], [0, 0, 1, 1], [], []>} : vector<8x64xbf16>, vector<64x64xbf16>, vector<8x64xf32> -> vector<8x64xf32>
    %169 = vector.extract_strided_slice %0 {offsets = [15, 0], sizes = [1, 64], strides = [1, 1]} : vector<22x128xf32> to vector<1x64xf32>
    %170 = vector.broadcast %169 : vector<1x64xf32> to vector<8x64xf32>
    %171 = arith.addf %168, %170 : vector<8x64xf32>
    %172 = arith.addf %171, %107 : vector<8x64xf32>
    %c1_53 = arith.constant 1 : index
    %c0_54 = arith.constant 0 : index
    %c0_55 = arith.constant 0 : index
    %173 = vector.load %arg6[%c1_53, %c0_54, %c0_55] : memref<2x64x64xbf16, #tpu.memory_space<vmem>>, vector<1x64x64xbf16>
    %174 = vector.shape_cast %173 : vector<1x64x64xbf16> to vector<64x64xbf16>
    %175 = arith.truncf %172 : vector<8x64xf32> to vector<8x64xbf16>
    %cst_56 = arith.constant dense<0.000000e+00> : vector<8x64xf32>
    %176 = tpu.matmul %175, %174, %cst_56 {dimension_numbers = #tpu.dot_dimension_numbers<[1], [0], [0], [1], [0, 0, 1, 1], [], []>} : vector<8x64xbf16>, vector<64x64xbf16>, vector<8x64xf32> -> vector<8x64xf32>
    %177 = vector.extract_strided_slice %0 {offsets = [16, 0], sizes = [1, 64], strides = [1, 1]} : vector<22x128xf32> to vector<1x64xf32>
    %178 = vector.broadcast %177 : vector<1x64xf32> to vector<8x64xf32>
    %179 = arith.addf %176, %178 : vector<8x64xf32>
    %180 = arith.addf %172, %179 : vector<8x64xf32>
    %c0_57 = arith.constant 0 : index
    %c0_58 = arith.constant 0 : index
    %181 = vector.load %arg7[%c0_57, %c0_58] : memref<64x32xbf16, #tpu.memory_space<vmem>>, vector<64x32xbf16>
    %182 = arith.truncf %180 : vector<8x64xf32> to vector<8x64xbf16>
    %cst_59 = arith.constant dense<0.000000e+00> : vector<8x32xf32>
    %183 = tpu.matmul %182, %181, %cst_59 {dimension_numbers = #tpu.dot_dimension_numbers<[1], [0], [0], [1], [0, 0, 1, 1], [], []>} : vector<8x64xbf16>, vector<64x32xbf16>, vector<8x32xf32> -> vector<8x32xf32>
    %184 = vector.extract_strided_slice %0 {offsets = [17, 0], sizes = [1, 32], strides = [1, 1]} : vector<22x128xf32> to vector<1x32xf32>
    %185 = vector.broadcast %184 : vector<1x32xf32> to vector<8x32xf32>
    %186 = arith.addf %183, %185 : vector<8x32xf32>
    %187 = vector.extract_strided_slice %0 {offsets = [18, 0], sizes = [1, 32], strides = [1, 1]} : vector<22x128xf32> to vector<1x32xf32>
    %188 = vector.extract_strided_slice %0 {offsets = [19, 0], sizes = [1, 32], strides = [1, 1]} : vector<22x128xf32> to vector<1x32xf32>
    %cst_60 = arith.constant dense<0.000000e+00> : vector<8xf32>
    %189 = vector.multi_reduction <add>, %186, %cst_60 [1] : vector<8x32xf32> to vector<8xf32>
    %190 = vector.shape_cast %189 : vector<8xf32> to vector<8x1xf32>
    %cst_61 = arith.constant 3.200000e+01 : f32
    %191 = vector.broadcast %cst_61 : f32 to vector<8x1xf32>
    %192 = arith.divf %190, %191 : vector<8x1xf32>
    %193 = vector.broadcast %192 : vector<8x1xf32> to vector<8x32xf32>
    %194 = arith.subf %186, %193 : vector<8x32xf32>
    %195 = arith.mulf %194, %194 : vector<8x32xf32>
    %cst_62 = arith.constant dense<0.000000e+00> : vector<8xf32>
    %196 = vector.multi_reduction <add>, %195, %cst_62 [1] : vector<8x32xf32> to vector<8xf32>
    %197 = vector.shape_cast %196 : vector<8xf32> to vector<8x1xf32>
    %cst_63 = arith.constant 3.200000e+01 : f32
    %198 = vector.broadcast %cst_63 : f32 to vector<8x1xf32>
    %199 = arith.divf %197, %198 : vector<8x1xf32>
    %200 = vector.broadcast %192 : vector<8x1xf32> to vector<8x32xf32>
    %201 = arith.subf %186, %200 : vector<8x32xf32>
    %cst_64 = arith.constant 9.99999974E-6 : f32
    %202 = vector.broadcast %cst_64 : f32 to vector<8x1xf32>
    %203 = arith.addf %199, %202 : vector<8x1xf32>
    %204 = math.rsqrt %203 : vector<8x1xf32>
    %205 = vector.broadcast %204 : vector<8x1xf32> to vector<8x32xf32>
    %206 = arith.mulf %201, %205 : vector<8x32xf32>
    %207 = vector.broadcast %187 : vector<1x32xf32> to vector<8x32xf32>
    %208 = arith.mulf %206, %207 : vector<8x32xf32>
    %209 = vector.broadcast %188 : vector<1x32xf32> to vector<8x32xf32>
    %210 = arith.addf %208, %209 : vector<8x32xf32>
    %cst_65 = arith.constant 0.000000e+00 : f32
    %211 = vector.broadcast %cst_65 : f32 to vector<8x32xf32>
    %212 = arith.maximumf %210, %211 : vector<8x32xf32>
    %c0_66 = arith.constant 0 : index
    %c0_67 = arith.constant 0 : index
    %213 = vector.load %arg8[%c0_66, %c0_67] : memref<32x16xbf16, #tpu.memory_space<vmem>>, vector<32x16xbf16>
    %214 = arith.truncf %212 : vector<8x32xf32> to vector<8x32xbf16>
    %cst_68 = arith.constant dense<0.000000e+00> : vector<8x16xf32>
    %215 = tpu.matmul %214, %213, %cst_68 {dimension_numbers = #tpu.dot_dimension_numbers<[1], [0], [0], [1], [0, 0, 1, 1], [], []>} : vector<8x32xbf16>, vector<32x16xbf16>, vector<8x16xf32> -> vector<8x16xf32>
    %216 = vector.extract_strided_slice %0 {offsets = [20, 0], sizes = [1, 16], strides = [1, 1]} : vector<22x128xf32> to vector<1x16xf32>
    %217 = vector.broadcast %216 : vector<1x16xf32> to vector<8x16xf32>
    %218 = arith.addf %215, %217 : vector<8x16xf32>
    %219 = vector.extract_strided_slice %218 {offsets = [0, 0], sizes = [8, 1], strides = [1, 1]} : vector<8x16xf32> to vector<8x1xf32>
    %220 = vector.extract_strided_slice %218 {offsets = [0, 1], sizes = [8, 3], strides = [1, 1]} : vector<8x16xf32> to vector<8x3xf32>
    %221 = vector.broadcast %219 : vector<8x1xf32> to vector<8x3xf32>
    %222 = arith.addf %221, %220 : vector<8x3xf32>
    %cst_69 = arith.constant dense<0.000000e+00> : vector<8xf32>
    %223 = vector.multi_reduction <add>, %220, %cst_69 [1] : vector<8x3xf32> to vector<8xf32>
    %224 = vector.shape_cast %223 : vector<8xf32> to vector<8x1xf32>
    %cst_70 = arith.constant 3.000000e+00 : f32
    %225 = vector.broadcast %cst_70 : f32 to vector<8x1xf32>
    %226 = arith.divf %224, %225 : vector<8x1xf32>
    %227 = vector.broadcast %226 : vector<8x1xf32> to vector<8x3xf32>
    %228 = arith.subf %222, %227 : vector<8x3xf32>
    %cst_71 = arith.constant dense<0xFF800000> : vector<8xf32>
    %229 = vector.multi_reduction <maximumf>, %228, %cst_71 [1] : vector<8x3xf32> to vector<8xf32>
    %230 = vector.shape_cast %229 : vector<8xf32> to vector<8x1xf32>
    %231 = vector.broadcast %230 : vector<8x1xf32> to vector<8x3xf32>
    %232 = arith.subf %228, %231 : vector<8x3xf32>
    %233 = math.exp %232 : vector<8x3xf32>
    %cst_72 = arith.constant dense<0.000000e+00> : vector<8xf32>
    %234 = vector.multi_reduction <add>, %233, %cst_72 [1] : vector<8x3xf32> to vector<8xf32>
    %235 = vector.shape_cast %234 : vector<8xf32> to vector<8x1xf32>
    %236 = tpu.reciprocal %235 {approx = true} : vector<8x1xf32> -> vector<8x1xf32>
    %237 = vector.broadcast %236 : vector<8x1xf32> to vector<8x3xf32>
    %238 = arith.mulf %233, %237 : vector<8x3xf32>
    %239 = vector.extract_strided_slice %218 {offsets = [0, 4], sizes = [8, 10], strides = [1, 1]} : vector<8x16xf32> to vector<8x10xf32>
    %cst_73 = arith.constant dense<0xFF800000> : vector<8xf32>
    %240 = vector.multi_reduction <maximumf>, %239, %cst_73 [1] : vector<8x10xf32> to vector<8xf32>
    %241 = vector.shape_cast %240 : vector<8xf32> to vector<8x1xf32>
    %242 = vector.broadcast %241 : vector<8x1xf32> to vector<8x10xf32>
    %243 = arith.subf %239, %242 : vector<8x10xf32>
    %244 = math.exp %243 : vector<8x10xf32>
    %cst_74 = arith.constant dense<0.000000e+00> : vector<8xf32>
    %245 = vector.multi_reduction <add>, %244, %cst_74 [1] : vector<8x10xf32> to vector<8xf32>
    %246 = vector.shape_cast %245 : vector<8xf32> to vector<8x1xf32>
    %247 = tpu.reciprocal %246 {approx = true} : vector<8x1xf32> -> vector<8x1xf32>
    %248 = vector.broadcast %247 : vector<8x1xf32> to vector<8x10xf32>
    %249 = arith.mulf %244, %248 : vector<8x10xf32>
    %250 = vector.extract_strided_slice %0 {offsets = [21, 0], sizes = [1, 10], strides = [1, 1]} : vector<22x128xf32> to vector<1x10xf32>
    %251 = vector.broadcast %250 : vector<1x10xf32> to vector<8x10xf32>
    %252 = arith.mulf %249, %251 : vector<8x10xf32>
    %cst_75 = arith.constant dense<0.000000e+00> : vector<8xf32>
    %253 = vector.multi_reduction <add>, %252, %cst_75 [1] : vector<8x10xf32> to vector<8xf32>
    %254 = vector.shape_cast %253 : vector<8xf32> to vector<8x1xf32>
    %255 = vector.extract_strided_slice %218 {offsets = [0, 14], sizes = [8, 1], strides = [1, 1]} : vector<8x16xf32> to vector<8x1xf32>
    %256 = vector.extract_strided_slice %218 {offsets = [0, 15], sizes = [8, 1], strides = [1, 1]} : vector<8x16xf32> to vector<8x1xf32>
    %257 = arith.negf %256 : vector<8x1xf32>
    %258 = math.exp %257 : vector<8x1xf32>
    %cst_76 = arith.constant 1.000000e+00 : f32
    %259 = vector.broadcast %cst_76 : f32 to vector<8x1xf32>
    %260 = arith.addf %259, %258 : vector<8x1xf32>
    %261 = arith.divf %259, %260 : vector<8x1xf32>
    %cst_77 = arith.constant 0.000000e+00 : f32
    %262 = vector.broadcast %cst_77 : f32 to vector<8x128xf32>
    %c0_78 = arith.constant 0 : index
    %c0_79 = arith.constant 0 : index
    %263 = vector.load %arg9[%c0_78, %c0_79] : memref<8x128xf32, #tpu.memory_space<vmem>>, vector<8x128xf32>
    tpu.vector_store %arg9[%c0_78, %c0_79], %262 {strides = array<i32>} : memref<8x128xf32, #tpu.memory_space<vmem>>, vector<8x128xf32>,
    %c0_80 = arith.constant 0 : index
    %c0_81 = arith.constant 0 : index
    %264 = vector.load %arg9[%c0_80, %c0_81] : memref<8x128xf32, #tpu.memory_space<vmem>>, vector<8x3xf32>
    tpu.vector_store %arg9[%c0_80, %c0_81], %238 {strides = array<i32>} : memref<8x128xf32, #tpu.memory_space<vmem>>, vector<8x3xf32>,
    %c0_82 = arith.constant 0 : index
    %c3 = arith.constant 3 : index
    %265 = vector.load %arg9[%c0_82, %c3] : memref<8x128xf32, #tpu.memory_space<vmem>>, vector<8x1xf32>
    tpu.vector_store %arg9[%c0_82, %c3], %254 {strides = array<i32>} : memref<8x128xf32, #tpu.memory_space<vmem>>, vector<8x1xf32>,
    %c0_83 = arith.constant 0 : index
    %c4 = arith.constant 4 : index
    %266 = vector.load %arg9[%c0_83, %c4] : memref<8x128xf32, #tpu.memory_space<vmem>>, vector<8x1xf32>
    tpu.vector_store %arg9[%c0_83, %c4], %255 {strides = array<i32>} : memref<8x128xf32, #tpu.memory_space<vmem>>, vector<8x1xf32>,
    %c0_84 = arith.constant 0 : index
    %c5 = arith.constant 5 : index
    %267 = vector.load %arg9[%c0_84, %c5] : memref<8x128xf32, #tpu.memory_space<vmem>>, vector<8x1xf32>
    tpu.vector_store %arg9[%c0_84, %c5], %261 {strides = array<i32>} : memref<8x128xf32, #tpu.memory_space<vmem>>, vector<8x1xf32>,
    return
  }
  func.func @transform_0(%arg0: i32) -> (i32, i32) {
    %c0_i32 = arith.constant 0 : i32
    %c0_i32_0 = arith.constant 0 : i32
    return %arg0, %c0_i32 : i32, i32
  }
  func.func @transform_1(%arg0: i32) -> (i32, i32) {
    %c0_i32 = arith.constant 0 : i32
    %c0_i32_0 = arith.constant 0 : i32
    %c0_i32_1 = arith.constant 0 : i32
    return %c0_i32, %c0_i32_0 : i32, i32
  }
  func.func @transform_2(%arg0: i32) -> (i32, i32) {
    %c0_i32 = arith.constant 0 : i32
    %c0_i32_0 = arith.constant 0 : i32
    %c0_i32_1 = arith.constant 0 : i32
    return %c0_i32, %c0_i32_0 : i32, i32
  }
  func.func @transform_3(%arg0: i32) -> (i32, i32, i32) {
    %c0_i32 = arith.constant 0 : i32
    %c0_i32_0 = arith.constant 0 : i32
    %c0_i32_1 = arith.constant 0 : i32
    %c0_i32_2 = arith.constant 0 : i32
    return %c0_i32, %c0_i32_0, %c0_i32_1 : i32, i32, i32
  }
  func.func @transform_4(%arg0: i32) -> (i32, i32, i32) {
    %c0_i32 = arith.constant 0 : i32
    %c0_i32_0 = arith.constant 0 : i32
    %c0_i32_1 = arith.constant 0 : i32
    %c0_i32_2 = arith.constant 0 : i32
    return %c0_i32, %c0_i32_0, %c0_i32_1 : i32, i32, i32
  }
  func.func @transform_5(%arg0: i32) -> (i32, i32, i32) {
    %c0_i32 = arith.constant 0 : i32
    %c0_i32_0 = arith.constant 0 : i32
    %c0_i32_1 = arith.constant 0 : i32
    %c0_i32_2 = arith.constant 0 : i32
    return %c0_i32, %c0_i32_0, %c0_i32_1 : i32, i32, i32
  }
  func.func @transform_6(%arg0: i32) -> (i32, i32) {
    %c0_i32 = arith.constant 0 : i32
    %c0_i32_0 = arith.constant 0 : i32
    %c0_i32_1 = arith.constant 0 : i32
    return %c0_i32, %c0_i32_0 : i32, i32
  }
  func.func @transform_7(%arg0: i32) -> (i32, i32) {
    %c0_i32 = arith.constant 0 : i32
    %c0_i32_0 = arith.constant 0 : i32
    %c0_i32_1 = arith.constant 0 : i32
    return %c0_i32, %c0_i32_0 : i32, i32
  }
  func.func @transform_8(%arg0: i32) -> (i32, i32) {
    %c0_i32 = arith.constant 0 : i32
    %c0_i32_0 = arith.constant 0 : i32
    return %arg0, %c0_i32 : i32, i32
  }
}

</mosaic_0001>

<llo_original>
// kernel: poker_forward.1
$region0: #{poker_forward.1}
  #allocation0 [shape = 'u32[]', space=smem, size = 0x4, offset = 0x4, fixed_abs, tag = 'smem constant byte address 0x4 - core index']
  #allocation1 [shape = 'u32[144,128]{1,0:T(1,128)}', space=vmem, size = 0x12000, scoped, tag = 'internal scratch']
  %s0 = inlined_call_operand.hbm [shape: f32[8,17], index: 0, kind: input, shape index: {}]
  %s1 = inlined_call_operand.hbm [shape: f32[22,128], index: 1, kind: input, shape index: {}]
  %s2 = inlined_call_operand.hbm [shape: bf16[17,128], index: 2, kind: input, shape index: {}]
  %s3 = inlined_call_operand.vmem [shape: bf16[2,128,128], index: 3, kind: input, shape index: {}]
  %s4 = inlined_call_operand.vmem [shape: bf16[2,128,64], index: 4, kind: input, shape index: {}]
  %s5 = inlined_call_operand.vmem [shape: bf16[2,64,64], index: 5, kind: input, shape index: {}]
  %s6 = inlined_call_operand.vmem [shape: bf16[64,32], index: 6, kind: input, shape index: {}]
  %s7 = inlined_call_operand.vmem [shape: bf16[32,16], index: 7, kind: input, shape index: {}]
  %s8 = inlined_call_operand.vmem [shape: f32[8,128], index: 8, kind: output, shape index: {}]
  %s9 = sld [smem:[#allocation0]]
  $region54: #{poker_forward.1} parent=0
    _
  %s11 = ssub.s32 1, %s9
  %s12 = scalar_select 0, %s11, %s9
  $region1: #{poker_forward.1} parent=0
    #allocation2 [shape = 'u8[4096]{0}', space=vmem, size = 0x1000, scoped, tag = 'input window, operand 0, single buffered']
    #allocation3 [shape = 's32[1]{0}', space=sflag, size = 0x4, scoped, tag = 'scoped memory for poker_forward.1']
    #allocation4 [shape = 'u8[12288]{0}', space=vmem, size = 0x3000, scoped, tag = 'input window, operand 1, single buffered']
    #allocation5 [shape = 's32[1]{0}', space=sflag, size = 0x4, scoped, tag = 'scoped memory for poker_forward.1']
    #allocation6 [shape = 'u8[6144]{0}', space=vmem, size = 0x1800, scoped, tag = 'input window, operand 2, single buffered']
    %13 = vsyncpa [#allocation3], 0
    %14 = vsyncpa [#allocation5], 0
    // Predicated region
    $region2: #{poker_forward.1} parent=1 // pred_check
      _
    $region3: #{poker_forward.1} parent=1 // pred_check_branch
      %16 = sbr.rel (0) target = $region5
    $region4: #{poker_forward.1} parent=1 // pred_region
      %s18 = ssub.s32 128, 128
      %19 = vsyncadd [#allocation3], %s18
      %s21 = sshll.u32 [#allocation2], 4
      %s22 = int_to_ptr.vmem [resolvable:$true] %s21
      %24 = dma.hbm_to_vmem [thread:$0]  %s0, 128, %s22, [#allocation3]
    $region5: #{poker_forward.1} parent=1 // pred_fallthru
      _
    // Predicated region
    $region6: #{poker_forward.1} parent=1 // pred_check
      _
    $region7: #{poker_forward.1} parent=1 // pred_check_branch
      %26 = sbr.rel (0) target = $region9
    $region8: #{poker_forward.1} parent=1 // pred_region
      %s28 = ssub.s32 384, 384
      %29 = vsyncadd [#allocation5], %s28
      %s30 = sshll.u32 [#allocation4], 4
      %s31 = int_to_ptr.vmem [resolvable:$true] %s30
      %36 = dma.hbm_to_vmem [thread:$0]  %s1, 384, %s31, [#allocation5], 128, 128, 8
    $region9: #{poker_forward.1} parent=1 // pred_fallthru
      _
    // Predicated region
    $region10: #{poker_forward.1} parent=1 // pred_check
      _
    $region11: #{poker_forward.1} parent=1 // pred_check_branch
      %38 = sbr.rel (0) target = $region13
    $region12: #{poker_forward.1} parent=1 // pred_region
      %s40 = ssub.s32 192, 192
      %41 = vsyncadd [#allocation5], %s40
      %s42 = sshll.u32 [#allocation6], 4
      %s43 = int_to_ptr.vmem [resolvable:$true] %s42
      %48 = dma.hbm_to_vmem [thread:$0]  %s2, 192, %s43, [#allocation5], 64, 64, 4
    $region13: #{poker_forward.1} parent=1 // pred_fallthru
      _
    // Predicated region
    $region14: #{poker_forward.1} parent=1 // pred_check
      _
    $region15: #{poker_forward.1} parent=1 // pred_check_branch
      %50 = sbr.rel (0) target = $region17
    $region16: #{poker_forward.1} parent=1 // pred_region
      _
    $region17: #{poker_forward.1} parent=1 // pred_fallthru
      _
    // Predicated region
    $region18: #{poker_forward.1} parent=1 // pred_check
      _
    $region19: #{poker_forward.1} parent=1 // pred_check_branch
      %52 = sbr.rel (0) target = $region21
    $region20: #{poker_forward.1} parent=1 // pred_region
      _
    $region21: #{poker_forward.1} parent=1 // pred_fallthru
      _
    // Predicated region
    $region22: #{poker_forward.1} parent=1 // pred_check
      _
    $region23: #{poker_forward.1} parent=1 // pred_check_branch
      %54 = sbr.rel (0) target = $region25
    $region24: #{poker_forward.1} parent=1 // pred_region
      _
    $region25: #{poker_forward.1} parent=1 // pred_fallthru
      _
    // Predicated region
    $region26: #{poker_forward.1} parent=1 // pred_check
      _
    $region27: #{poker_forward.1} parent=1 // pred_check_branch
      %56 = sbr.rel (0) target = $region29
    $region28: #{poker_forward.1} parent=1 // pred_region
      _
    $region29: #{poker_forward.1} parent=1 // pred_fallthru
      _
    // Predicated region
    $region30: #{poker_forward.1} parent=1 // pred_check
      _
    $region31: #{poker_forward.1} parent=1 // pred_check_branch
      %58 = sbr.rel (0) target = $region33
    $region32: #{poker_forward.1} parent=1 // pred_region
      _
    $region33: #{poker_forward.1} parent=1 // pred_fallthru
      _
    // Predicated region
    $region34: #{poker_forward.1} parent=1 // pred_check
      _
    $region35: #{poker_forward.1} parent=1 // pred_check_branch
      %60 = sbr.rel (0) target = $region37
    $region36: #{poker_forward.1} parent=1 // pred_region
      %61 = dma.done [#allocation3], 128
    $region37: #{poker_forward.1} parent=1 // pred_fallthru
      _
    // Predicated region
    $region38: #{poker_forward.1} parent=1 // pred_check
      _
    $region39: #{poker_forward.1} parent=1 // pred_check_branch
      %63 = sbr.rel (0) target = $region41
    $region40: #{poker_forward.1} parent=1 // pred_region
      %64 = dma.done [#allocation5], 384
    $region41: #{poker_forward.1} parent=1 // pred_fallthru
      _
    // Predicated region
    $region42: #{poker_forward.1} parent=1 // pred_check
      _
    $region43: #{poker_forward.1} parent=1 // pred_check_branch
      %66 = sbr.rel (0) target = $region45
    $region44: #{poker_forward.1} parent=1 // pred_region
      %67 = dma.done [#allocation5], 192
    $region45: #{poker_forward.1} parent=1 // pred_fallthru
      _
    %v69 = vld [vmem:[#allocation4] sm:$0xff]
    %v70 = vld [vmem:[#allocation4 + $0x8] sm:$0xff]
    %v71 = vld [vmem:[#allocation4 + $0x10] sm:$0x3f]
    %v72 = vld [vmem:[#allocation2] sm:$0xff]
    %v73 = vld [vmem:[#allocation6] sm:$0xf]
    %v74 = vld [vmem:[#allocation6 + $0x4] sm:$0xf]
    %v75 = vld [vmem:[#allocation6 + $0x8] sm:$0x1]
    %v76 = vpack.c.bf16 %v72, %v72
    %v77 = vlaneseq
    %v78 = vshrl.u32 %v77, 7
    %v79 = vsub.s32 0, %v78
    %v80 = vrot.slane %v69, %v79
    %v84 = vunpack.c.l.b16 %v73
    %v85 = vunpack.c.l.b16 %v74
    %v86 = vunpack.c.l.b16 %v75
    %v87 = vpack.c.b16 %v85, %v84
    %v88 = vpack.c.b16 %v86, %v86
    %vm90 = vcmask 138240
    %v92 = vsel %vm90, %v76, 0
    %vm94 = vcmask 1040384
    %v95 = vsel 0, 4294967295, 65535
    %v96 = vsel %vm94, %v95, 0
    %v98 = vand.u32 %v88, %v96
    %100 = vmatprep.subr.bf16.mxu0 0
    %101 = vmatpush1.bf16.msra.mxu0 %v87
    %102 = vmatprep.subr.bf16.mxu0 0
    %103 = vmatpush1.bf16.msra.mxu0 %v98
    %104 = vmatprep.subr.bf16.mxu0 0
    %105 = vmatpush1.bf16.msra.mxu0 0
    %106 = vmatprep.subr.bf16.mxu0 0
    %107 = vmatpush1.bf16.msra.mxu0 0
    %108 = vmatprep.subr.bf16.mxu0 0
    %109 = vmatpush1.bf16.msra.mxu0 0
    %110 = vmatprep.subr.bf16.mxu0 0
    %111 = vmatpush1.bf16.msra.mxu0 0
    %112 = vmatprep.subr.bf16.mxu0 0
    %113 = vmatpush1.bf16.msra.mxu0 0
    %114 = vmatprep.subr.bf16.mxu0 0
    %115 = vmatpush1.bf16.msra.mxu0 0
    %116 = vmatprep.subr.bf16.mxu0 0
    %117 = vmatpush1.bf16.msra.mxu0 0
    %118 = vmatprep.subr.bf16.mxu0 0
    %119 = vmatpush1.bf16.msra.mxu0 0
    %120 = vmatprep.subr.bf16.mxu0 0
    %121 = vmatpush1.bf16.msra.mxu0 0
    %122 = vmatprep.subr.bf16.mxu0 0
    %123 = vmatpush1.bf16.msra.mxu0 0
    %124 = vmatprep.subr.bf16.mxu0 0
    %125 = vmatpush1.bf16.msra.mxu0 0
    %126 = vmatprep.subr.bf16.mxu0 0
    %127 = vmatpush1.bf16.msra.mxu0 0
    %128 = vmatprep.subr.bf16.mxu0 0
    %129 = vmatpush1.bf16.msra.mxu0 0
    %130 = vmatprep.subr.bf16.mxu0 0
    %131 = vmatpush1.bf16.msra.mxu0 0
    %132 = vmatprep.mubr.bf16.mxu0 0
    %133 = vmatmul.mubr.bf16.gmra.mrb[0].mxu0 %v92
    %v134 = vpop.f32.mrb[0].mxu0
    %v135 = vadd.f32 %v80, %v134
    %v136 = vpop.f32.mrb[0].mxu0
    %v137 = vpop.f32.mrb[0].mxu0
    %v138 = vpop.f32.mrb[0].mxu0
    %139 = vdwg.mxu0
    %140 = vadd.xlane.f32.xlu0 %v135
    %v141 = vpop.xlane.xlu0 %140
    %v142 = vrcp.pop 128.0
    %v143 = vmul.f32 %v141, %v142
    %v144 = vsub.f32 %v135, %v143
    %v145 = vmul.f32 %v144, %v144
    %146 = vadd.xlane.f32.xlu0 %v145
    %v147 = vpop.xlane.xlu0 %146
    %v148 = vmul.f32 %v147, %v142
    %v149 = vadd.f32 %v148, 1e-05
    %v150 = vrsqrt.pop %v149
    %v151 = vmul.f32 %v144, %v150
    %v152 = vlaneseq
    %v153 = vshrl.u32 %v152, 7
    %v154 = vsub.s32 1, %v153
    %v155 = vrot.slane %v69, %v154
    %v156 = vmul.f32 %v151, %v155
    %v157 = vlaneseq
    %v158 = vshrl.u32 %v157, 7
    %v159 = vsub.s32 2, %v158
    %v160 = vrot.slane %v69, %v159
    %v161 = vadd.f32 %v156, %v160
    %v162 = vmax.f32 %v161, 0.0
    %163 = vadd.xlane.f32.xlu0 %v162
    %v164 = vpop.xlane.xlu0 %163
    %v165 = vmul.f32 %v164, %v142
    %v166 = vsub.f32 %v162, %v165
    %v167 = vmul.f32 %v166, %v166
    %168 = vadd.xlane.f32.xlu0 %v167
    %v169 = vpop.xlane.xlu0 %168
    %v170 = vmul.f32 %v169, %v142
    %v171 = vadd.f32 %v170, 1e-05
    %v172 = vrsqrt.pop %v171
    %v173 = vmul.f32 %v166, %v172
    %v174 = vlaneseq
    %v175 = vshrl.u32 %v174, 7
    %v176 = vsub.s32 3, %v175
    %v177 = vrot.slane %v69, %v176
    %v178 = vmul.f32 %v173, %v177
    %v179 = vlaneseq
    %v180 = vshrl.u32 %v179, 7
    %v181 = vsub.s32 4, %v180
    %v182 = vrot.slane %v69, %v181
    %v183 = vadd.f32 %v178, %v182
    %v184 = vld [vmem:[%s3] sm:$0xf]
    %v185 = vld [vmem:[%s3 + $0x4] sm:$0xf]
    %v186 = vld [vmem:[%s3 + $0x8] sm:$0xf]
    %v187 = vld [vmem:[%s3 + $0xc] sm:$0xf]
    %v188 = vld [vmem:[%s3 + $0x10] sm:$0xf]
    %v189 = vld [vmem:[%s3 + $0x14] sm:$0xf]
    %v190 = vld [vmem:[%s3 + $0x18] sm:$0xf]
    %v191 = vld [vmem:[%s3 + $0x1c] sm:$0xf]
    %v192 = vld [vmem:[%s3 + $0x20] sm:$0xf]
    %v193 = vld [vmem:[%s3 + $0x24] sm:$0xf]
    %v194 = vld [vmem:[%s3 + $0x28] sm:$0xf]
    %v195 = vld [vmem:[%s3 + $0x2c] sm:$0xf]
    %v196 = vld [vmem:[%s3 + $0x30] sm:$0xf]
    %v197 = vld [vmem:[%s3 + $0x34] sm:$0xf]
    %v198 = vld [vmem:[%s3 + $0x38] sm:$0xf]
    %v199 = vld [vmem:[%s3 + $0x3c] sm:$0xf]
    %v200 = vpack.c.bf16 %v183, %v183
    %v201 = vlaneseq
    %v202 = vshrl.u32 %v201, 7
    %v203 = vsub.s32 5, %v202
    %v204 = vrot.slane %v69, %v203
    %v221 = vunpack.c.l.b16 %v184
    %v222 = vunpack.c.l.b16 %v185
    %v223 = vunpack.c.l.b16 %v186
    %v224 = vunpack.c.l.b16 %v187
    %v225 = vunpack.c.l.b16 %v188
    %v226 = vunpack.c.l.b16 %v189
    %v227 = vunpack.c.l.b16 %v190
    %v228 = vunpack.c.l.b16 %v191
    %v229 = vunpack.c.l.b16 %v192
    %v230 = vunpack.c.l.b16 %v193
    %v231 = vunpack.c.l.b16 %v194
    %v232 = vunpack.c.l.b16 %v195
    %v233 = vunpack.c.l.b16 %v196
    %v234 = vunpack.c.l.b16 %v197
    %v235 = vunpack.c.l.b16 %v198
    %v236 = vunpack.c.l.b16 %v199
    %v237 = vpack.c.b16 %v222, %v221
    %v238 = vpack.c.b16 %v224, %v223
    %v239 = vpack.c.b16 %v226, %v225
    %v240 = vpack.c.b16 %v228, %v227
    %v241 = vpack.c.b16 %v230, %v229
    %v242 = vpack.c.b16 %v232, %v231
    %v243 = vpack.c.b16 %v234, %v233
    %v244 = vpack.c.b16 %v236, %v235
    %253 = vmatprep.subr.bf16.mxu0 0
    %254 = vmatpush1.bf16.msra.mxu0 %v237
    %255 = vmatprep.subr.bf16.mxu0 0
    %256 = vmatpush1.bf16.msra.mxu0 %v238
    %257 = vmatprep.subr.bf16.mxu0 0
    %258 = vmatpush1.bf16.msra.mxu0 %v239
    %259 = vmatprep.subr.bf16.mxu0 0
    %260 = vmatpush1.bf16.msra.mxu0 %v240
    %261 = vmatprep.subr.bf16.mxu0 0
    %262 = vmatpush1.bf16.msra.mxu0 %v241
    %263 = vmatprep.subr.bf16.mxu0 0
    %264 = vmatpush1.bf16.msra.mxu0 %v242
    %265 = vmatprep.subr.bf16.mxu0 0
    %266 = vmatpush1.bf16.msra.mxu0 %v243
    %267 = vmatprep.subr.bf16.mxu0 0
    %268 = vmatpush1.bf16.msra.mxu0 %v244
    %269 = vmatprep.subr.bf16.mxu0 0
    %270 = vmatpush1.bf16.msra.mxu0 0
    %271 = vmatprep.subr.bf16.mxu0 0
    %272 = vmatpush1.bf16.msra.mxu0 0
    %273 = vmatprep.subr.bf16.mxu0 0
    %274 = vmatpush1.bf16.msra.mxu0 0
    %275 = vmatprep.subr.bf16.mxu0 0
    %276 = vmatpush1.bf16.msra.mxu0 0
    %277 = vmatprep.subr.bf16.mxu0 0
    %278 = vmatpush1.bf16.msra.mxu0 0
    %279 = vmatprep.subr.bf16.mxu0 0
    %280 = vmatpush1.bf16.msra.mxu0 0
    %281 = vmatprep.subr.bf16.mxu0 0
    %282 = vmatpush1.bf16.msra.mxu0 0
    %283 = vmatprep.subr.bf16.mxu0 0
    %284 = vmatpush1.bf16.msra.mxu0 0
    %285 = vmatprep.mubr.bf16.mxu0 0
    %286 = vmatmul.mubr.bf16.gmra.mrb[0].mxu0 %v200
    %v287 = vpop.f32.mrb[0].mxu0
    %v288 = vadd.f32 %v204, %v287
    %v289 = vpop.f32.mrb[0].mxu0
    %v290 = vpop.f32.mrb[0].mxu0
    %v291 = vpop.f32.mrb[0].mxu0
    %292 = vdwg.mxu0
    %v293 = vmax.f32 %v288, 0.0
    %294 = vadd.xlane.f32.xlu0 %v293
    %v295 = vpop.xlane.xlu0 %294
    %v296 = vmul.f32 %v295, %v142
    %v297 = vsub.f32 %v293, %v296
    %v298 = vmul.f32 %v297, %v297
    %299 = vadd.xlane.f32.xlu0 %v298
    %v300 = vpop.xlane.xlu0 %299
    %v301 = vmul.f32 %v300, %v142
    %v302 = vadd.f32 %v301, 1e-05
    %v303 = vrsqrt.pop %v302
    %v304 = vmul.f32 %v297, %v303
    %v305 = vlaneseq
    %v306 = vshrl.u32 %v305, 7
    %v307 = vsub.s32 6, %v306
    %v308 = vrot.slane %v69, %v307
    %v309 = vmul.f32 %v304, %v308
    %v310 = vlaneseq
    %v311 = vshrl.u32 %v310, 7
    %v312 = vsub.s32 7, %v311
    %v313 = vrot.slane %v69, %v312
    %v314 = vadd.f32 %v309, %v313
    %s315 = scalar_lea.vmem %s3, 64
    %v316 = vld [vmem:[%s315] sm:$0xf]
    %v317 = vld [vmem:[%s315 + $0x4] sm:$0xf]
    %v318 = vld [vmem:[%s315 + $0x8] sm:$0xf]
    %v319 = vld [vmem:[%s315 + $0xc] sm:$0xf]
    %v320 = vld [vmem:[%s315 + $0x10] sm:$0xf]
    %v321 = vld [vmem:[%s315 + $0x14] sm:$0xf]
    %v322 = vld [vmem:[%s315 + $0x18] sm:$0xf]
    %v323 = vld [vmem:[%s315 + $0x1c] sm:$0xf]
    %v324 = vld [vmem:[%s315 + $0x20] sm:$0xf]
    %v325 = vld [vmem:[%s315 + $0x24] sm:$0xf]
    %v326 = vld [vmem:[%s315 + $0x28] sm:$0xf]
    %v327 = vld [vmem:[%s315 + $0x2c] sm:$0xf]
    %v328 = vld [vmem:[%s315 + $0x30] sm:$0xf]
    %v329 = vld [vmem:[%s315 + $0x34] sm:$0xf]
    %v330 = vld [vmem:[%s315 + $0x38] sm:$0xf]
    %v331 = vld [vmem:[%s315 + $0x3c] sm:$0xf]
    %v332 = vpack.c.bf16 %v314, %v314
    %v333 = vlaneseq
    %v334 = vshrl.u32 %v333, 7
    %v335 = vsub.s32 0, %v334
    %v336 = vrot.slane %v70, %v335
    %v353 = vunpack.c.l.b16 %v316
    %v354 = vunpack.c.l.b16 %v317
    %v355 = vunpack.c.l.b16 %v318
    %v356 = vunpack.c.l.b16 %v319
    %v357 = vunpack.c.l.b16 %v320
    %v358 = vunpack.c.l.b16 %v321
    %v359 = vunpack.c.l.b16 %v322
    %v360 = vunpack.c.l.b16 %v323
    %v361 = vunpack.c.l.b16 %v324
    %v362 = vunpack.c.l.b16 %v325
    %v363 = vunpack.c.l.b16 %v326
    %v364 = vunpack.c.l.b16 %v327
    %v365 = vunpack.c.l.b16 %v328
    %v366 = vunpack.c.l.b16 %v329
    %v367 = vunpack.c.l.b16 %v330
    %v368 = vunpack.c.l.b16 %v331
    %v369 = vpack.c.b16 %v354, %v353
    %v370 = vpack.c.b16 %v356, %v355
    %v371 = vpack.c.b16 %v358, %v357
    %v372 = vpack.c.b16 %v360, %v359
    %v373 = vpack.c.b16 %v362, %v361
    %v374 = vpack.c.b16 %v364, %v363
    %v375 = vpack.c.b16 %v366, %v365
    %v376 = vpack.c.b16 %v368, %v367
    %385 = vmatprep.subr.bf16.mxu0 0
    %386 = vmatpush1.bf16.msra.mxu0 %v369
    %387 = vmatprep.subr.bf16.mxu0 0
    %388 = vmatpush1.bf16.msra.mxu0 %v370
    %389 = vmatprep.subr.bf16.mxu0 0
    %390 = vmatpush1.bf16.msra.mxu0 %v371
    %391 = vmatprep.subr.bf16.mxu0 0
    %392 = vmatpush1.bf16.msra.mxu0 %v372
    %393 = vmatprep.subr.bf16.mxu0 0
    %394 = vmatpush1.bf16.msra.mxu0 %v373
    %395 = vmatprep.subr.bf16.mxu0 0
    %396 = vmatpush1.bf16.msra.mxu0 %v374
    %397 = vmatprep.subr.bf16.mxu0 0
    %398 = vmatpush1.bf16.msra.mxu0 %v375
    %399 = vmatprep.subr.bf16.mxu0 0
    %400 = vmatpush1.bf16.msra.mxu0 %v376
    %401 = vmatprep.subr.bf16.mxu0 0
    %402 = vmatpush1.bf16.msra.mxu0 0
    %403 = vmatprep.subr.bf16.mxu0 0
    %404 = vmatpush1.bf16.msra.mxu0 0
    %405 = vmatprep.subr.bf16.mxu0 0
    %406 = vmatpush1.bf16.msra.mxu0 0
    %407 = vmatprep.subr.bf16.mxu0 0
    %408 = vmatpush1.bf16.msra.mxu0 0
    %409 = vmatprep.subr.bf16.mxu0 0
    %410 = vmatpush1.bf16.msra.mxu0 0
    %411 = vmatprep.subr.bf16.mxu0 0
    %412 = vmatpush1.bf16.msra.mxu0 0
    %413 = vmatprep.subr.bf16.mxu0 0
    %414 = vmatpush1.bf16.msra.mxu0 0
    %415 = vmatprep.subr.bf16.mxu0 0
    %416 = vmatpush1.bf16.msra.mxu0 0
    %417 = vmatprep.mubr.bf16.mxu0 0
    %418 = vmatmul.mubr.bf16.gmra.mrb[0].mxu0 %v332
    %v419 = vpop.f32.mrb[0].mxu0
    %v420 = vadd.f32 %v336, %v419
    %v421 = vpop.f32.mrb[0].mxu0
    %v422 = vpop.f32.mrb[0].mxu0
    %v423 = vpop.f32.mrb[0].mxu0
    %424 = vdwg.mxu0
    %v425 = vadd.f32 %v420, %v162
    %v426 = vmax.f32 %v425, 0.0
    %v427 = vld [vmem:[%s4] sm:$0xf]
    %v428 = vld [vmem:[%s4 + $0x4] sm:$0xf]
    %v429 = vld [vmem:[%s4 + $0x8] sm:$0xf]
    %v430 = vld [vmem:[%s4 + $0xc] sm:$0xf]
    %v431 = vld [vmem:[%s4 + $0x10] sm:$0xf]
    %v432 = vld [vmem:[%s4 + $0x14] sm:$0xf]
    %v433 = vld [vmem:[%s4 + $0x18] sm:$0xf]
    %v434 = vld [vmem:[%s4 + $0x1c] sm:$0xf]
    %v435 = vld [vmem:[%s4 + $0x20] sm:$0xf]
    %v436 = vld [vmem:[%s4 + $0x24] sm:$0xf]
    %v437 = vld [vmem:[%s4 + $0x28] sm:$0xf]
    %v438 = vld [vmem:[%s4 + $0x2c] sm:$0xf]
    %v439 = vld [vmem:[%s4 + $0x30] sm:$0xf]
    %v440 = vld [vmem:[%s4 + $0x34] sm:$0xf]
    %v441 = vld [vmem:[%s4 + $0x38] sm:$0xf]
    %v442 = vld [vmem:[%s4 + $0x3c] sm:$0xf]
    %v443 = vpack.c.bf16 %v426, %v426
    %v444 = vlaneseq
    %v445 = vshrl.u32 %v444, 7
    %v446 = vsub.s32 1, %v445
    %v447 = vrot.slane %v70, %v446
    %v464 = vunpack.c.l.b16 %v427
    %v465 = vunpack.c.l.b16 %v428
    %v466 = vunpack.c.l.b16 %v429
    %v467 = vunpack.c.l.b16 %v430
    %v468 = vunpack.c.l.b16 %v431
    %v469 = vunpack.c.l.b16 %v432
    %v470 = vunpack.c.l.b16 %v433
    %v471 = vunpack.c.l.b16 %v434
    %v472 = vunpack.c.l.b16 %v435
    %v473 = vunpack.c.l.b16 %v436
    %v474 = vunpack.c.l.b16 %v437
    %v475 = vunpack.c.l.b16 %v438
    %v476 = vunpack.c.l.b16 %v439
    %v477 = vunpack.c.l.b16 %v440
    %v478 = vunpack.c.l.b16 %v441
    %v479 = vunpack.c.l.b16 %v442
    %v480 = vpack.c.b16 %v465, %v464
    %v481 = vpack.c.b16 %v467, %v466
    %v482 = vpack.c.b16 %v469, %v468
    %v483 = vpack.c.b16 %v471, %v470
    %v484 = vpack.c.b16 %v473, %v472
    %v485 = vpack.c.b16 %v475, %v474
    %v486 = vpack.c.b16 %v477, %v476
    %v487 = vpack.c.b16 %v479, %v478
    %496 = vmatprep.subr.bf16.mxu0 0
    %497 = vmatpush1.bf16.msra.mxu0 %v480
    %498 = vmatprep.subr.bf16.mxu0 0
    %499 = vmatpush1.bf16.msra.mxu0 %v481
    %500 = vmatprep.subr.bf16.mxu0 0
    %501 = vmatpush1.bf16.msra.mxu0 %v482
    %502 = vmatprep.subr.bf16.mxu0 0
    %503 = vmatpush1.bf16.msra.mxu0 %v483
    %504 = vmatprep.subr.bf16.mxu0 0
    %505 = vmatpush1.bf16.msra.mxu0 %v484
    %506 = vmatprep.subr.bf16.mxu0 0
    %507 = vmatpush1.bf16.msra.mxu0 %v485
    %508 = vmatprep.subr.bf16.mxu0 0
    %509 = vmatpush1.bf16.msra.mxu0 %v486
    %510 = vmatprep.subr.bf16.mxu0 0
    %511 = vmatpush1.bf16.msra.mxu0 %v487
    %512 = vmatprep.subr.bf16.mxu0 0
    %513 = vmatpush1.bf16.msra.mxu0 0
    %514 = vmatprep.subr.bf16.mxu0 0
    %515 = vmatpush1.bf16.msra.mxu0 0
    %516 = vmatprep.subr.bf16.mxu0 0
    %517 = vmatpush1.bf16.msra.mxu0 0
    %518 = vmatprep.subr.bf16.mxu0 0
    %519 = vmatpush1.bf16.msra.mxu0 0
    %520 = vmatprep.subr.bf16.mxu0 0
    %521 = vmatpush1.bf16.msra.mxu0 0
    %522 = vmatprep.subr.bf16.mxu0 0
    %523 = vmatpush1.bf16.msra.mxu0 0
    %524 = vmatprep.subr.bf16.mxu0 0
    %525 = vmatpush1.bf16.msra.mxu0 0
    %526 = vmatprep.subr.bf16.mxu0 0
    %527 = vmatpush1.bf16.msra.mxu0 0
    %528 = vmatprep.mubr.bf16.mxu0 0
    %529 = vmatmul.mubr.bf16.gmra.mrb[0].mxu0 %v443
    %v530 = vpop.f32.mrb[0].mxu0
    %v531 = vadd.f32 %v447, %v530
    %v532 = vpop.f32.mrb[0].mxu0
    %v533 = vpop.f32.mrb[0].mxu0
    %v534 = vpop.f32.mrb[0].mxu0
    %535 = vdwg.mxu0
    %536 = vadd.xlane.f32.xlu0 %v426
    %v537 = vpop.xlane.xlu0 %536
    %v538 = vmul.f32 %v537, %v142
    %v539 = vsub.f32 %v426, %v538
    %v540 = vmul.f32 %v539, %v539
    %541 = vadd.xlane.f32.xlu0 %v540
    %v542 = vpop.xlane.xlu0 %541
    %v543 = vmul.f32 %v542, %v142
    %v544 = vadd.f32 %v543, 1e-05
    %v545 = vrsqrt.pop %v544
    %v546 = vmul.f32 %v539, %v545
    %v547 = vlaneseq
    %v548 = vshrl.u32 %v547, 7
    %v549 = vsub.s32 2, %v548
    %v550 = vrot.slane %v70, %v549
    %v551 = vmul.f32 %v546, %v550
    %v552 = vlaneseq
    %v553 = vshrl.u32 %v552, 7
    %v554 = vsub.s32 3, %v553
    %v555 = vrot.slane %v70, %v554
    %v556 = vadd.f32 %v551, %v555
    %s557 = scalar_lea.vmem %s4, 64
    %v558 = vld [vmem:[%s557] sm:$0xf]
    %v559 = vld [vmem:[%s557 + $0x4] sm:$0xf]
    %v560 = vld [vmem:[%s557 + $0x8] sm:$0xf]
    %v561 = vld [vmem:[%s557 + $0xc] sm:$0xf]
    %v562 = vld [vmem:[%s557 + $0x10] sm:$0xf]
    %v563 = vld [vmem:[%s557 + $0x14] sm:$0xf]
    %v564 = vld [vmem:[%s557 + $0x18] sm:$0xf]
    %v565 = vld [vmem:[%s557 + $0x1c] sm:$0xf]
    %v566 = vld [vmem:[%s557 + $0x20] sm:$0xf]
    %v567 = vld [vmem:[%s557 + $0x24] sm:$0xf]
    %v568 = vld [vmem:[%s557 + $0x28] sm:$0xf]
    %v569 = vld [vmem:[%s557 + $0x2c] sm:$0xf]
    %v570 = vld [vmem:[%s557 + $0x30] sm:$0xf]
    %v571 = vld [vmem:[%s557 + $0x34] sm:$0xf]
    %v572 = vld [vmem:[%s557 + $0x38] sm:$0xf]
    %v573 = vld [vmem:[%s557 + $0x3c] sm:$0xf]
    %v574 = vpack.c.bf16 %v556, %v556
    %v575 = vlaneseq
    %v576 = vshrl.u32 %v575, 7
    %v577 = vsub.s32 4, %v576
    %v578 = vrot.slane %v70, %v577
    %v595 = vunpack.c.l.b16 %v558
    %v596 = vunpack.c.l.b16 %v559
    %v597 = vunpack.c.l.b16 %v560
    %v598 = vunpack.c.l.b16 %v561
    %v599 = vunpack.c.l.b16 %v562
    %v600 = vunpack.c.l.b16 %v563
    %v601 = vunpack.c.l.b16 %v564
    %v602 = vunpack.c.l.b16 %v565
    %v603 = vunpack.c.l.b16 %v566
    %v604 = vunpack.c.l.b16 %v567
    %v605 = vunpack.c.l.b16 %v568
    %v606 = vunpack.c.l.b16 %v569
    %v607 = vunpack.c.l.b16 %v570
    %v608 = vunpack.c.l.b16 %v571
    %v609 = vunpack.c.l.b16 %v572
    %v610 = vunpack.c.l.b16 %v573
    %v611 = vpack.c.b16 %v596, %v595
    %v612 = vpack.c.b16 %v598, %v597
    %v613 = vpack.c.b16 %v600, %v599
    %v614 = vpack.c.b16 %v602, %v601
    %v615 = vpack.c.b16 %v604, %v603
    %v616 = vpack.c.b16 %v606, %v605
    %v617 = vpack.c.b16 %v608, %v607
    %v618 = vpack.c.b16 %v610, %v609
    %627 = vmatprep.subr.bf16.mxu0 0
    %628 = vmatpush1.bf16.msra.mxu0 %v611
    %629 = vmatprep.subr.bf16.mxu0 0
    %630 = vmatpush1.bf16.msra.mxu0 %v612
    %631 = vmatprep.subr.bf16.mxu0 0
    %632 = vmatpush1.bf16.msra.mxu0 %v613
    %633 = vmatprep.subr.bf16.mxu0 0
    %634 = vmatpush1.bf16.msra.mxu0 %v614
    %635 = vmatprep.subr.bf16.mxu0 0
    %636 = vmatpush1.bf16.msra.mxu0 %v615
    %637 = vmatprep.subr.bf16.mxu0 0
    %638 = vmatpush1.bf16.msra.mxu0 %v616
    %639 = vmatprep.subr.bf16.mxu0 0
    %640 = vmatpush1.bf16.msra.mxu0 %v617
    %641 = vmatprep.subr.bf16.mxu0 0
    %642 = vmatpush1.bf16.msra.mxu0 %v618
    %643 = vmatprep.subr.bf16.mxu0 0
    %644 = vmatpush1.bf16.msra.mxu0 0
    %645 = vmatprep.subr.bf16.mxu0 0
    %646 = vmatpush1.bf16.msra.mxu0 0
    %647 = vmatprep.subr.bf16.mxu0 0
    %648 = vmatpush1.bf16.msra.mxu0 0
    %649 = vmatprep.subr.bf16.mxu0 0
    %650 = vmatpush1.bf16.msra.mxu0 0
    %651 = vmatprep.subr.bf16.mxu0 0
    %652 = vmatpush1.bf16.msra.mxu0 0
    %653 = vmatprep.subr.bf16.mxu0 0
    %654 = vmatpush1.bf16.msra.mxu0 0
    %655 = vmatprep.subr.bf16.mxu0 0
    %656 = vmatpush1.bf16.msra.mxu0 0
    %657 = vmatprep.subr.bf16.mxu0 0
    %658 = vmatpush1.bf16.msra.mxu0 0
    %659 = vmatprep.mubr.bf16.mxu0 0
    %660 = vmatmul.mubr.bf16.gmra.mrb[0].mxu0 %v574
    %v661 = vpop.f32.mrb[0].mxu0
    %v662 = vadd.f32 %v578, %v661
    %v663 = vpop.f32.mrb[0].mxu0
    %v664 = vpop.f32.mrb[0].mxu0
    %v665 = vpop.f32.mrb[0].mxu0
    %666 = vdwg.mxu0
    %v667 = vmax.f32 %v662, 0.0
    %vm668 = vcmask 523264
    %v669 = vsel %vm668, %v667, 0.0
    %670 = vadd.xlane.f32.xlu0 %v669
    %v671 = vpop.xlane.xlu0 %670
    %v672 = vrcp.pop 64.0
    %v673 = vmul.f32 %v671, %v672
    %v674 = vsub.f32 %v667, %v673
    %v675 = vmul.f32 %v674, %v674
    %v676 = vsel %vm668, %v675, 0.0
    %677 = vadd.xlane.f32.xlu0 %v676
    %v678 = vpop.xlane.xlu0 %677
    %v679 = vmul.f32 %v678, %v672
    %v680 = vadd.f32 %v679, 1e-05
    %v681 = vrsqrt.pop %v680
    %v682 = vmul.f32 %v674, %v681
    %v683 = vlaneseq
    %v684 = vshrl.u32 %v683, 7
    %v685 = vsub.s32 5, %v684
    %v686 = vrot.slane %v70, %v685
    %v687 = vmul.f32 %v682, %v686
    %v688 = vlaneseq
    %v689 = vshrl.u32 %v688, 7
    %v690 = vsub.s32 6, %v689
    %v691 = vrot.slane %v70, %v690
    %v692 = vadd.f32 %v687, %v691
    %v693 = vld [vmem:[%s5] sm:$0xf]
    %v694 = vld [vmem:[%s5 + $0x4] sm:$0xf]
    %v695 = vld [vmem:[%s5 + $0x8] sm:$0xf]
    %v696 = vld [vmem:[%s5 + $0xc] sm:$0xf]
    %v697 = vld [vmem:[%s5 + $0x10] sm:$0xf]
    %v698 = vld [vmem:[%s5 + $0x14] sm:$0xf]
    %v699 = vld [vmem:[%s5 + $0x18] sm:$0xf]
    %v700 = vld [vmem:[%s5 + $0x1c] sm:$0xf]
    %v701 = vpack.c.bf16 %v692, %v692
    %v702 = vlaneseq
    %v703 = vshrl.u32 %v702, 7
    %v704 = vsub.s32 7, %v703
    %v705 = vrot.slane %v70, %v704
    %v714 = vunpack.c.l.b16 %v693
    %v715 = vunpack.c.l.b16 %v694
    %v716 = vunpack.c.l.b16 %v695
    %v717 = vunpack.c.l.b16 %v696
    %v718 = vunpack.c.l.b16 %v697
    %v719 = vunpack.c.l.b16 %v698
    %v720 = vunpack.c.l.b16 %v699
    %v721 = vunpack.c.l.b16 %v700
    %v722 = vpack.c.b16 %v715, %v714
    %v723 = vpack.c.b16 %v717, %v716
    %v724 = vpack.c.b16 %v719, %v718
    %v725 = vpack.c.b16 %v721, %v720
    %v731 = vsel %vm668, %v701, 0
    %733 = vmatprep.subr.bf16.mxu0 0
    %734 = vmatpush1.bf16.msra.mxu0 %v722
    %735 = vmatprep.subr.bf16.mxu0 0
    %736 = vmatpush1.bf16.msra.mxu0 %v723
    %737 = vmatprep.subr.bf16.mxu0 0
    %738 = vmatpush1.bf16.msra.mxu0 %v724
    %739 = vmatprep.subr.bf16.mxu0 0
    %740 = vmatpush1.bf16.msra.mxu0 %v725
    %741 = vmatprep.subr.bf16.mxu0 0
    %742 = vmatpush1.bf16.msra.mxu0 0
    %743 = vmatprep.subr.bf16.mxu0 0
    %744 = vmatpush1.bf16.msra.mxu0 0
    %745 = vmatprep.subr.bf16.mxu0 0
    %746 = vmatpush1.bf16.msra.mxu0 0
    %747 = vmatprep.subr.bf16.mxu0 0
    %748 = vmatpush1.bf16.msra.mxu0 0
    %749 = vmatprep.subr.bf16.mxu0 0
    %750 = vmatpush1.bf16.msra.mxu0 0
    %751 = vmatprep.subr.bf16.mxu0 0
    %752 = vmatpush1.bf16.msra.mxu0 0
    %753 = vmatprep.subr.bf16.mxu0 0
    %754 = vmatpush1.bf16.msra.mxu0 0
    %755 = vmatprep.subr.bf16.mxu0 0
    %756 = vmatpush1.bf16.msra.mxu0 0
    %757 = vmatprep.subr.bf16.mxu0 0
    %758 = vmatpush1.bf16.msra.mxu0 0
    %759 = vmatprep.subr.bf16.mxu0 0
    %760 = vmatpush1.bf16.msra.mxu0 0
    %761 = vmatprep.subr.bf16.mxu0 0
    %762 = vmatpush1.bf16.msra.mxu0 0
    %763 = vmatprep.subr.bf16.mxu0 0
    %764 = vmatpush1.bf16.msra.mxu0 0
    %765 = vmatprep.mubr.bf16.mxu0 0
    %766 = vmatmul.mubr.bf16.gmra.mrb[0].mxu0 %v731
    %v767 = vpop.f32.mrb[0].mxu0
    %v768 = vadd.f32 %v705, %v767
    %v769 = vpop.f32.mrb[0].mxu0
    %v770 = vpop.f32.mrb[0].mxu0
    %v771 = vpop.f32.mrb[0].mxu0
    %772 = vdwg.mxu0
    %v773 = vadd.f32 %v768, %v531
    %s774 = scalar_lea.vmem %s5, 32
    %v775 = vld [vmem:[%s774] sm:$0xf]
    %v776 = vld [vmem:[%s774 + $0x4] sm:$0xf]
    %v777 = vld [vmem:[%s774 + $0x8] sm:$0xf]
    %v778 = vld [vmem:[%s774 + $0xc] sm:$0xf]
    %v779 = vld [vmem:[%s774 + $0x10] sm:$0xf]
    %v780 = vld [vmem:[%s774 + $0x14] sm:$0xf]
    %v781 = vld [vmem:[%s774 + $0x18] sm:$0xf]
    %v782 = vld [vmem:[%s774 + $0x1c] sm:$0xf]
    %v783 = vpack.c.bf16 %v773, %v773
    %v784 = vlaneseq
    %v785 = vshrl.u32 %v784, 7
    %v786 = vsub.s32 0, %v785
    %v787 = vrot.slane %v71, %v786
    %v796 = vunpack.c.l.b16 %v775
    %v797 = vunpack.c.l.b16 %v776
    %v798 = vunpack.c.l.b16 %v777
    %v799 = vunpack.c.l.b16 %v778
    %v800 = vunpack.c.l.b16 %v779
    %v801 = vunpack.c.l.b16 %v780
    %v802 = vunpack.c.l.b16 %v781
    %v803 = vunpack.c.l.b16 %v782
    %v804 = vpack.c.b16 %v797, %v796
    %v805 = vpack.c.b16 %v799, %v798
    %v806 = vpack.c.b16 %v801, %v800
    %v807 = vpack.c.b16 %v803, %v802
    %v813 = vsel %vm668, %v783, 0
    %815 = vmatprep.subr.bf16.mxu0 0
    %816 = vmatpush1.bf16.msra.mxu0 %v804
    %817 = vmatprep.subr.bf16.mxu0 0
    %818 = vmatpush1.bf16.msra.mxu0 %v805
    %819 = vmatprep.subr.bf16.mxu0 0
    %820 = vmatpush1.bf16.msra.mxu0 %v806
    %821 = vmatprep.subr.bf16.mxu0 0
    %822 = vmatpush1.bf16.msra.mxu0 %v807
    %823 = vmatprep.subr.bf16.mxu0 0
    %824 = vmatpush1.bf16.msra.mxu0 0
    %825 = vmatprep.subr.bf16.mxu0 0
    %826 = vmatpush1.bf16.msra.mxu0 0
    %827 = vmatprep.subr.bf16.mxu0 0
    %828 = vmatpush1.bf16.msra.mxu0 0
    %829 = vmatprep.subr.bf16.mxu0 0
    %830 = vmatpush1.bf16.msra.mxu0 0
    %831 = vmatprep.subr.bf16.mxu0 0
    %832 = vmatpush1.bf16.msra.mxu0 0
    %833 = vmatprep.subr.bf16.mxu0 0
    %834 = vmatpush1.bf16.msra.mxu0 0
    %835 = vmatprep.subr.bf16.mxu0 0
    %836 = vmatpush1.bf16.msra.mxu0 0
    %837 = vmatprep.subr.bf16.mxu0 0
    %838 = vmatpush1.bf16.msra.mxu0 0
    %839 = vmatprep.subr.bf16.mxu0 0
    %840 = vmatpush1.bf16.msra.mxu0 0
    %841 = vmatprep.subr.bf16.mxu0 0
    %842 = vmatpush1.bf16.msra.mxu0 0
    %843 = vmatprep.subr.bf16.mxu0 0
    %844 = vmatpush1.bf16.msra.mxu0 0
    %845 = vmatprep.subr.bf16.mxu0 0
    %846 = vmatpush1.bf16.msra.mxu0 0
    %847 = vmatprep.mubr.bf16.mxu0 0
    %848 = vmatmul.mubr.bf16.gmra.mrb[0].mxu0 %v813
    %v849 = vpop.f32.mrb[0].mxu0
    %v850 = vadd.f32 %v787, %v849
    %v851 = vpop.f32.mrb[0].mxu0
    %v852 = vpop.f32.mrb[0].mxu0
    %v853 = vpop.f32.mrb[0].mxu0
    %854 = vdwg.mxu0
    %v855 = vadd.f32 %v773, %v850
    %v856 = vld [vmem:[%s6] sm:$0xf]
    %v857 = vld [vmem:[%s6 + $0x4] sm:$0xf]
    %v858 = vld [vmem:[%s6 + $0x8] sm:$0xf]
    %v859 = vld [vmem:[%s6 + $0xc] sm:$0xf]
    %v860 = vld [vmem:[%s6 + $0x10] sm:$0xf]
    %v861 = vld [vmem:[%s6 + $0x14] sm:$0xf]
    %v862 = vld [vmem:[%s6 + $0x18] sm:$0xf]
    %v863 = vld [vmem:[%s6 + $0x1c] sm:$0xf]
    %v864 = vpack.c.bf16 %v855, %v855
    %v865 = vlaneseq
    %v866 = vshrl.u32 %v865, 7
    %v867 = vsub.s32 1, %v866
    %v868 = vrot.slane %v71, %v867
    %v877 = vunpack.c.l.b16 %v856
    %v878 = vunpack.c.l.b16 %v857
    %v879 = vunpack.c.l.b16 %v858
    %v880 = vunpack.c.l.b16 %v859
    %v881 = vunpack.c.l.b16 %v860
    %v882 = vunpack.c.l.b16 %v861
    %v883 = vunpack.c.l.b16 %v862
    %v884 = vunpack.c.l.b16 %v863
    %v885 = vpack.c.b16 %v878, %v877
    %v886 = vpack.c.b16 %v880, %v879
    %v887 = vpack.c.b16 %v882, %v881
    %v888 = vpack.c.b16 %v884, %v883
    %v894 = vsel %vm668, %v864, 0
    %896 = vmatprep.subr.bf16.mxu0 0
    %897 = vmatpush1.bf16.msra.mxu0 %v885
    %898 = vmatprep.subr.bf16.mxu0 0
    %899 = vmatpush1.bf16.msra.mxu0 %v886
    %900 = vmatprep.subr.bf16.mxu0 0
    %901 = vmatpush1.bf16.msra.mxu0 %v887
    %902 = vmatprep.subr.bf16.mxu0 0
    %903 = vmatpush1.bf16.msra.mxu0 %v888
    %904 = vmatprep.subr.bf16.mxu0 0
    %905 = vmatpush1.bf16.msra.mxu0 0
    %906 = vmatprep.subr.bf16.mxu0 0
    %907 = vmatpush1.bf16.msra.mxu0 0
    %908 = vmatprep.subr.bf16.mxu0 0
    %909 = vmatpush1.bf16.msra.mxu0 0
    %910 = vmatprep.subr.bf16.mxu0 0
    %911 = vmatpush1.bf16.msra.mxu0 0
    %912 = vmatprep.subr.bf16.mxu0 0
    %913 = vmatpush1.bf16.msra.mxu0 0
    %914 = vmatprep.subr.bf16.mxu0 0
    %915 = vmatpush1.bf16.msra.mxu0 0
    %916 = vmatprep.subr.bf16.mxu0 0
    %917 = vmatpush1.bf16.msra.mxu0 0
    %918 = vmatprep.subr.bf16.mxu0 0
    %919 = vmatpush1.bf16.msra.mxu0 0
    %920 = vmatprep.subr.bf16.mxu0 0
    %921 = vmatpush1.bf16.msra.mxu0 0
    %922 = vmatprep.subr.bf16.mxu0 0
    %923 = vmatpush1.bf16.msra.mxu0 0
    %924 = vmatprep.subr.bf16.mxu0 0
    %925 = vmatpush1.bf16.msra.mxu0 0
    %926 = vmatprep.subr.bf16.mxu0 0
    %927 = vmatpush1.bf16.msra.mxu0 0
    %928 = vmatprep.mubr.bf16.mxu0 0
    %929 = vmatmul.mubr.bf16.gmra.mrb[0].mxu0 %v894
    %v930 = vpop.f32.mrb[0].mxu0
    %v931 = vadd.f32 %v868, %v930
    %v932 = vpop.f32.mrb[0].mxu0
    %v933 = vpop.f32.mrb[0].mxu0
    %v934 = vpop.f32.mrb[0].mxu0
    %935 = vdwg.mxu0
    %vm936 = vcmask 261120
    %v937 = vsel %vm936, %v931, 0.0
    %938 = vadd.xlane.f32.xlu0 %v937
    %v939 = vpop.xlane.xlu0 %938
    %v940 = vrcp.pop 32.0
    %v941 = vmul.f32 %v939, %v940
    %v942 = vsub.f32 %v931, %v941
    %v943 = vmul.f32 %v942, %v942
    %v944 = vsel %vm936, %v943, 0.0
    %945 = vadd.xlane.f32.xlu0 %v944
    %v946 = vpop.xlane.xlu0 %945
    %v947 = vmul.f32 %v946, %v940
    %v948 = vadd.f32 %v947, 1e-05
    %v949 = vrsqrt.pop %v948
    %v950 = vmul.f32 %v942, %v949
    %v951 = vlaneseq
    %v952 = vshrl.u32 %v951, 7
    %v953 = vsub.s32 2, %v952
    %v954 = vrot.slane %v71, %v953
    %v955 = vmul.f32 %v950, %v954
    %v956 = vlaneseq
    %v957 = vshrl.u32 %v956, 7
    %v958 = vsub.s32 3, %v957
    %v959 = vrot.slane %v71, %v958
    %v960 = vadd.f32 %v955, %v959
    %v961 = vmax.f32 %v960, 0.0
    %v962 = vld [vmem:[%s7] sm:$0xf]
    %v963 = vld [vmem:[%s7 + $0x4] sm:$0xf]
    %v964 = vld [vmem:[%s7 + $0x8] sm:$0xf]
    %v965 = vld [vmem:[%s7 + $0xc] sm:$0xf]
    %v966 = vpack.c.bf16 %v961, %v961
    %v967 = vlaneseq
    %v968 = vshrl.u32 %v967, 7
    %v969 = vsub.s32 4, %v968
    %v970 = vrot.slane %v71, %v969
    %v975 = vunpack.c.l.b16 %v962
    %v976 = vunpack.c.l.b16 %v963
    %v977 = vunpack.c.l.b16 %v964
    %v978 = vunpack.c.l.b16 %v965
    %v979 = vpack.c.b16 %v976, %v975
    %v980 = vpack.c.b16 %v978, %v977
    %v984 = vsel %vm936, %v966, 0
    %986 = vmatprep.subr.bf16.mxu0 0
    %987 = vmatpush1.bf16.msra.mxu0 %v979
    %988 = vmatprep.subr.bf16.mxu0 0
    %989 = vmatpush1.bf16.msra.mxu0 %v980
    %990 = vmatprep.subr.bf16.mxu0 0
    %991 = vmatpush1.bf16.msra.mxu0 0
    %992 = vmatprep.subr.bf16.mxu0 0
    %993 = vmatpush1.bf16.msra.mxu0 0
    %994 = vmatprep.subr.bf16.mxu0 0
    %995 = vmatpush1.bf16.msra.mxu0 0
    %996 = vmatprep.subr.bf16.mxu0 0
    %997 = vmatpush1.bf16.msra.mxu0 0
    %998 = vmatprep.subr.bf16.mxu0 0
    %999 = vmatpush1.bf16.msra.mxu0 0
    %1000 = vmatprep.subr.bf16.mxu0 0
    %1001 = vmatpush1.bf16.msra.mxu0 0
    %1002 = vmatprep.subr.bf16.mxu0 0
    %1003 = vmatpush1.bf16.msra.mxu0 0
    %1004 = vmatprep.subr.bf16.mxu0 0
    %1005 = vmatpush1.bf16.msra.mxu0 0
    %1006 = vmatprep.subr.bf16.mxu0 0
    %1007 = vmatpush1.bf16.msra.mxu0 0
    %1008 = vmatprep.subr.bf16.mxu0 0
    %1009 = vmatpush1.bf16.msra.mxu0 0
    %1010 = vmatprep.subr.bf16.mxu0 0
    %1011 = vmatpush1.bf16.msra.mxu0 0
    %1012 = vmatprep.subr.bf16.mxu0 0
    %1013 = vmatpush1.bf16.msra.mxu0 0
    %1014 = vmatprep.subr.bf16.mxu0 0
    %1015 = vmatpush1.bf16.msra.mxu0 0
    %1016 = vmatprep.subr.bf16.mxu0 0
    %1017 = vmatpush1.bf16.msra.mxu0 0
    %1018 = vmatprep.mubr.bf16.mxu0 0
    %1019 = vmatmul.mubr.bf16.gmra.mrb[0].mxu0 %v984
    %v1020 = vpop.f32.mrb[0].mxu0
    %v1021 = vadd.f32 %v970, %v1020
    %v1022 = vpop.f32.mrb[0].mxu0
    %v1023 = vpop.f32.mrb[0].mxu0
    %v1024 = vpop.f32.mrb[0].mxu0
    %1025 = vdwg.mxu0
    %1027 = vset.pattern.permute.xlu0 0
    %1028 = vperm.xlu0 %1027, %v1021
    %v1029 = vpop.permute.xlu0 %1028
    %v1031 = vadd.f32 %v1029, %v1021
    %1032 = vrot.lane.b32.xlu0 %v1021, 127
    %v1033 = vpop.permute.xlu0 %1032
    %vm1035 = vcmask 23552
    %v1036 = vsel %vm1035, %v1033, 0.0
    %1037 = vadd.xlane.f32.xlu0 %v1036
    %v1038 = vpop.xlane.xlu0 %1037
    %v1039 = vrcp.pop 3.0
    %v1040 = vmul.f32 %v1038, %v1039
    %v1041 = vsub.f32 %v1031, %v1040
    %vm1042 = vcmask 31752
    %v1043 = vsel %vm1042, %v1041, -inf
    %1044 = vmax.xlane.f32.xlu0 %v1043
    %v1045 = vpop.xlane.xlu0 %1044
    %v1046 = vsub.f32 %v1041, %v1045
    %v1047 = vmul.f32 %v1046, 1.442695
    %v1048 = vpow.pop %v1047
    %1050 = vrot.lane.b32.xlu0 %v1048, 127
    %v1051 = vpop.permute.xlu0 %1050
    %v1053 = vsel %vm1035, %v1051, 0.0
    %1054 = vadd.xlane.f32.xlu0 %v1053
    %v1055 = vpop.xlane.xlu0 %1054
    %v1056 = vrcp.pop %v1055
    %v1057 = vmul.f32 %v1048, %v1056
    %vm1058 = vcmask 113696
    %v1059 = vsel %vm1058, %v1021, -inf
    %1060 = vmax.xlane.f32.xlu0 %v1059
    %v1061 = vpop.xlane.xlu0 %1060
    %v1062 = vsub.f32 %v1021, %v1061
    %v1063 = vmul.f32 %v1062, 1.442695
    %v1064 = vpow.pop %v1063
    %1066 = vrot.lane.b32.xlu0 %v1064, 124
    %v1067 = vpop.permute.xlu0 %1066
    %vm1069 = vcmask 80896
    %v1070 = vsel %vm1069, %v1067, 0.0
    %1071 = vadd.xlane.f32.xlu0 %v1070
    %v1072 = vpop.xlane.xlu0 %1071
    %v1073 = vrcp.pop %v1072
    %v1074 = vmul.f32 %v1064, %v1073
    %v1075 = vlaneseq
    %v1076 = vshrl.u32 %v1075, 7
    %v1077 = vsub.s32 5, %v1076
    %v1078 = vrot.slane %v71, %v1077
    %1080 = vrot.lane.b32.xlu0 %v1078, 4
    %v1081 = vpop.permute.xlu0 %1080
    %v1083 = vmul.f32 %v1074, %v1081
    %1085 = vrot.lane.b32.xlu0 %v1083, 124
    %v1086 = vpop.permute.xlu0 %1085
    %v1088 = vsel %vm1069, %v1086, 0.0
    %1089 = vadd.xlane.f32.xlu0 %v1088
    %v1090 = vpop.xlane.xlu0 %1089
    %v1091 = vxor.u32 %v1021, 2147483648
    %v1092 = vmul.f32 %v1091, 1.442695
    %v1093 = vpow.pop %v1092
    %v1094 = vadd.f32 %v1093, 1.0
    %v1095 = vrcp.pop %v1094
    %v1096 = vmul.f32 1.0, %v1095
    %1097 = vst [vmem:[%s8] sm:$0xff] 0.0
    %1099 = vrot.lane.b32.xlu0 %v1057, 127
    %v1100 = vpop.permute.xlu0 %1099
    %1102 = vst.msk [vmem:[%s8] sm:$0xff] %vm1035, %v1100
    %vm1103 = vcmask 31768
    %1104 = vst.msk [vmem:[%s8] sm:$0xff] %vm1103, %v1090
    %1105 = vrot.lane.b32.xlu0 %v1021, 118
    %v1106 = vpop.permute.xlu0 %1105
    %vm1108 = vcmask 39968
    %1109 = vst.msk [vmem:[%s8] sm:$0xff] %vm1108, %v1106
    %1111 = vrot.lane.b32.xlu0 %v1096, 118
    %v1112 = vpop.permute.xlu0 %1111
    %vm1114 = vcmask 48168
    %1115 = vst.msk [vmem:[%s8] sm:$0xff] %vm1114, %v1112
    // Predicated region
    $region46: #{poker_forward.1} parent=1 // pred_check
      _
    $region47: #{poker_forward.1} parent=1 // pred_check_branch
      %1117 = sbr.rel (0) target = $region49
    $region48: #{poker_forward.1} parent=1 // pred_region
      _
    $region49: #{poker_forward.1} parent=1 // pred_fallthru
      _
    // Predicated region
    $region50: #{poker_forward.1} parent=1 // pred_check
      _
    $region51: #{poker_forward.1} parent=1 // pred_check_branch
      %1119 = sbr.rel (0) target = $region53
    $region52: #{poker_forward.1} parent=1 // pred_region
      _
    $region53: #{poker_forward.1} parent=1 // pred_fallthru
      _
    %1120 = vsyncpa [#allocation3], 1
    %1121 = vsyncpa [#allocation5], 1

</llo_original>
